<compile_context>
chip_gen: v7x
topology: tpu7x:2x2x1
jax: 0.10.0
libtpu: 0.0.40
codegen_flags: <defaults>
</compile_context>

<pallas_src>
import functools

import jax
import jax.numpy as jnp
from jax.experimental import pallas as pl
from jax.experimental.pallas import tpu as pltpu


C2_TILE = 128  # lane-dense output-channel tile


def _pick_tile_rows(H, W, kk_c1, live_budget_bytes=6 << 20):
    """Rows per in-kernel row tile: TH | H, bounded live bytes, M=TH*W aligned
    to 256 (v6e/v7x MXU) if possible, else 128 (v5e), else 8."""
    divisors = [th for th in range(1, H + 1) if H % th == 0]

    def live_bytes(th):
        m = th * W
        return m * kk_c1 * 4 + 2 * m * C2_TILE * 4   # f32 patch + acc/activation

    fitting = [th for th in divisors if live_bytes(th) <= live_budget_bytes]
    if not fitting:
        fitting = [1]
    for align in (256, 128, 8, 1):
        aligned = [th for th in fitting if (th * W) % align == 0]
        if aligned:
            return max(aligned)
    return max(fitting)


def _vmem_capacity_bytes():
    try:
        info = pltpu.get_tpu_info()
        cap = getattr(info, "vmem_capacity_bytes", None)
        if cap:
            return int(cap)
    except Exception:
        pass
    return 64 << 20   # conservative default (v7x physical VMEM)


def _conv_bn_silu_kernel(x_ref, w_ref, s_ref, b_ref, o_ref, *, K, TH, nT, W, C1):
    """One (image, c2_tile) grid step.

    x_ref: (1, Hp, Wp, C1)        zero-padded input image (Hp = nT*TH + K - 1)
    w_ref: (K*K*C1, C2_TILE)      conv weights, (kh, kw, c1) flattened
    s_ref: (1, C2_TILE)           BatchNorm scale  (f32)
    b_ref: (1, C2_TILE)           BatchNorm bias   (f32)
    o_ref: (1, nT*TH*W, C2_TILE)  flat (pixels, channels) lane-dense output
    """
    scale = s_ref[0]
    bias = b_ref[0]
    w = w_ref[...]
    for t in range(nT):                       # static unrolled row tiles
        r0 = t * TH
        taps = []
        for kh in range(K):
            for kw in range(K):
                taps.append(
                    x_ref[0, r0 + kh:r0 + kh + TH, kw:kw + W, :]
                    .reshape(TH * W, C1))
        # Fused im2col patch -> single MXU dot (contraction length K*K*C1).
        patch = jnp.concatenate(taps, axis=-1)                 # (TH*W, K*K*C1)
        acc = jnp.dot(patch, w, preferred_element_type=jnp.float32)
        y = acc * scale + bias                                  # BatchNorm (inference)
        y = y * jax.nn.sigmoid(y)                               # SiLU
        o_ref[0, r0 * W:(r0 + TH) * W, :] = y.astype(o_ref.dtype)


def conv_bn_silu(x_nhwc, w_hwio, bn_gamma, bn_beta, bn_mean, bn_var, eps=1e-5,
                 *, compute_dtype=jnp.float32):
    """x_nhwc: (B, H, W, C1); w_hwio: (K, K, C1, C2). Returns (B, H, W, C2)."""
    B, H, W, C1 = x_nhwc.shape
    K = w_hwio.shape[0]
    C2 = w_hwio.shape[-1]
    assert K % 2 == 1, "only odd kernel sizes supported (autopad => same shape)"
    # TODO(synk): stride > 1, groups > 1 and dilation > 1 are not implemented.
    P = K // 2
    Hp, Wp = H + 2 * P, W + 2 * P

    C2p = pl.cdiv(C2, C2_TILE) * C2_TILE        # pad channels to lane-dense tiles
    nC2 = C2p // C2_TILE

    # BatchNorm (inference form) -> per-channel scale/bias applied in the f32
    # epilogue (keeps the bf16 weight path precise when running var is tiny).
    scale = bn_gamma / jnp.sqrt(bn_var + eps)
    bias = bn_beta - bn_mean * scale
    s_k = jnp.pad(scale, (0, C2p - C2)).reshape(1, C2p).astype(jnp.float32)
    b_k = jnp.pad(bias, (0, C2p - C2)).reshape(1, C2p).astype(jnp.float32)

    # Weights flattened to (K*K*C1, C2p) for the single fused dot per tile.
    w_k = jnp.pad(w_hwio, ((0, 0), (0, 0), (0, 0), (0, C2p - C2)))
    w_k = w_k.reshape(K * K * C1, C2p).astype(compute_dtype)

    # Zero-pad spatially once; each grid step DMAs one whole padded image.
    x_pad = jnp.pad(x_nhwc, ((0, 0), (P, P), (P, P), (0, 0))).astype(compute_dtype)

    TH = _pick_tile_rows(H, W, K * K * C1)
    nT = H // TH

    kernel = functools.partial(_conv_bn_silu_kernel,
                               K=K, TH=TH, nT=nT, W=W, C1=C1)

    # Generation-aware VMEM budget (double-buffered blocks + headroom).
    in_item = jnp.dtype(compute_dtype).itemsize
    out_item = jnp.dtype(x_nhwc.dtype).itemsize
    x_blk = Hp * Wp * C1 * in_item
    w_blk = K * K * C1 * C2_TILE * in_item
    o_blk = H * W * C2_TILE * out_item
    blk_bytes = x_blk + w_blk + 2 * C2_TILE * 4 + o_blk
    vmem_cap = _vmem_capacity_bytes()
    vmem_limit = int(min(max(2 * blk_bytes + (8 << 20), 32 << 20),
                         int(0.75 * vmem_cap)))
    # TODO(synk): feature maps too large to fit whole-image blocks in VMEM need
    # a manual halo-DMA row-tiled path (memory_space=pl.ANY + make_async_copy).

    # Grid order: keep the bigger reusable operand constant over the inner axis
    # (its block index doesn't change -> Pallas skips the re-DMA).
    if nC2 > 1 and B > 1 and w_blk > x_blk:
        grid = (nC2, B)             # weight tile fixed across the inner B loop
        x_spec = pl.BlockSpec((1, Hp, Wp, C1), lambda c, b: (b, 0, 0, 0))
        w_spec = pl.BlockSpec((K * K * C1, C2_TILE), lambda c, b: (0, c))
        v_spec = pl.BlockSpec((1, C2_TILE), lambda c, b: (0, c))
        o_spec = pl.BlockSpec((1, H * W, C2_TILE), lambda c, b: (b, 0, c))
    else:
        grid = (B, nC2)             # image tile fixed across the inner nC2 loop
        x_spec = pl.BlockSpec((1, Hp, Wp, C1), lambda b, c: (b, 0, 0, 0))
        w_spec = pl.BlockSpec((K * K * C1, C2_TILE), lambda b, c: (0, c))
        v_spec = pl.BlockSpec((1, C2_TILE), lambda b, c: (0, c))
        o_spec = pl.BlockSpec((1, H * W, C2_TILE), lambda b, c: (b, 0, c))

    out = pl.pallas_call(
        kernel,
        out_shape=jax.ShapeDtypeStruct((B, H * W, C2p), x_nhwc.dtype),
        grid_spec=pltpu.PrefetchScalarGridSpec(
            num_scalar_prefetch=0,
            grid=grid,
            in_specs=[x_spec, w_spec, v_spec, v_spec],
            out_specs=o_spec,
        ),
        compiler_params=pltpu.CompilerParams(
            dimension_semantics=("parallel", "parallel"),
            vmem_limit_bytes=vmem_limit,
        ),
    )(x_pad, w_k, s_k, b_k)

    # (B, H*W, C2p) -> (B, H, W, C2): drop channel padding.
    return out.reshape(B, H, W, C2p)[..., :C2]


def conv_module_forward(x_nchw, w_oihw, bn_gamma, bn_beta, bn_mean, bn_var,
                        eps=1e-5, *, compute_dtype=jnp.float32):
    """PyTorch-equivalent forward: NCHW in, NCHW out."""
    x_nhwc = jnp.transpose(x_nchw, (0, 2, 3, 1))
    w_hwio = jnp.transpose(w_oihw, (2, 3, 1, 0))   # (O,I,Kh,Kw) -> (Kh,Kw,I,O)
    y_nhwc = conv_bn_silu(x_nhwc, w_hwio, bn_gamma, bn_beta, bn_mean, bn_var,
                          eps, compute_dtype=compute_dtype)
    return jnp.transpose(y_nhwc, (0, 3, 1, 2))


def _reference(x_nchw, w_oihw, bn_gamma, bn_beta, bn_mean, bn_var, eps=1e-5):
    K = w_oihw.shape[-1]
    P = K // 2
    y = jax.lax.conv_general_dilated(
        x_nchw, w_oihw, window_strides=(1, 1), padding=[(P, P), (P, P)],
        dimension_numbers=("NCHW", "OIHW", "NCHW"),
    )
    scale = (bn_gamma / jnp.sqrt(bn_var + eps)).reshape(1, -1, 1, 1)
    bias = (bn_beta - bn_mean * bn_gamma / jnp.sqrt(bn_var + eps)).reshape(1, -1, 1, 1)
    y = y * scale + bias
    return y * jax.nn.sigmoid(y)


if __name__ == "__main__":
    # Small shapes: Conv(c1=4, c2=8, k=3) on x: (B=2, C1=4, H=16, W=16)
    B, C1, H, W = 2, 4, 16, 16
    C2, K = 8, 3

    key = jax.random.PRNGKey(0)
    kx, kw, kg, kb, km, kv = jax.random.split(key, 6)

    x = jax.random.normal(kx, (B, C1, H, W), dtype=jnp.float32)
    # nn.Conv2d weight shape: (c2, c1, k, k), bias=False
    w = jax.random.normal(kw, (C2, C1, K, K), dtype=jnp.float32) * 0.1
    # nn.BatchNorm2d(c2) parameters / running stats (inference form)
    bn_gamma = 1.0 + 0.1 * jax.random.normal(kg, (C2,), dtype=jnp.float32)
    bn_beta = 0.1 * jax.random.normal(kb, (C2,), dtype=jnp.float32)
    bn_mean = 0.1 * jax.random.normal(km, (C2,), dtype=jnp.float32)
    bn_var = jnp.abs(jax.random.normal(kv, (C2,), dtype=jnp.float32)) + 0.5

    y_ref = _reference(x, w, bn_gamma, bn_beta, bn_mean, bn_var)

    # f32 MXU path (tight tolerance).
    y32 = conv_module_forward(x, w, bn_gamma, bn_beta, bn_mean, bn_var,
                              compute_dtype=jnp.float32)
    y32 = jax.block_until_ready(y32)
    assert y32.shape == (B, C2, H, W)
    assert jnp.allclose(y32, y_ref, atol=1e-4, rtol=1e-4)

    # bf16 MXU path (valid on v5e/v6e/v7x; f32 accumulation, f32 BN epilogue).
    ybf = conv_module_forward(x, w, bn_gamma, bn_beta, bn_mean, bn_var,
                              compute_dtype=jnp.bfloat16)
    ybf = jax.block_until_ready(ybf)
    assert ybf.shape == (B, C2, H, W)
    assert jnp.allclose(ybf, y_ref, atol=1e-1, rtol=1e-1)

    print("KERNEL_OK")
</pallas_src>

<mosaic_0001>
module attributes {stable_mosaic.version = 11 : i64} {
  func.func @_conv_bn_silu_kernel(%arg0: i32, %arg1: i32, %arg2: memref<1x18x18x4xf32, #tpu.memory_space<vmem>>, %arg3: memref<36x128xf32, #tpu.memory_space<vmem>>, %arg4: memref<1x128xf32, #tpu.memory_space<vmem>>, %arg5: memref<1x128xf32, #tpu.memory_space<vmem>>, %arg6: memref<1x256x128xf32, #tpu.memory_space<vmem>>) attributes {dimension_semantics = [#tpu.dimension_semantics<parallel>, #tpu.dimension_semantics<parallel>], iteration_bounds = array<i64: 2, 1>, scalar_prefetch = 0 : i64, scratch_operands = 0 : i64, tpu.core_type = #tpu.core_type<tc>, window_params = [{transform_indices = @transform_0, window_bounds = array<i64: 1, 18, 18, 4>}, {transform_indices = @transform_1, window_bounds = array<i64: 36, 128>}, {transform_indices = @transform_2, window_bounds = array<i64: 1, 128>}, {transform_indices = @transform_3, window_bounds = array<i64: 1, 128>}, {transform_indices = @transform_4, window_bounds = array<i64: 1, 256, 128>}]} {
    %c0 = arith.constant 0 : index
    %c0_0 = arith.constant 0 : index
    %0 = vector.load %arg4[%c0, %c0_0] : memref<1x128xf32, #tpu.memory_space<vmem>>, vector<1x128xf32>
    %1 = vector.shape_cast %0 : vector<1x128xf32> to vector<128xf32>
    %c0_1 = arith.constant 0 : index
    %c0_2 = arith.constant 0 : index
    %2 = vector.load %arg5[%c0_1, %c0_2] : memref<1x128xf32, #tpu.memory_space<vmem>>, vector<1x128xf32>
    %3 = vector.shape_cast %2 : vector<1x128xf32> to vector<128xf32>
    %c0_3 = arith.constant 0 : index
    %c0_4 = arith.constant 0 : index
    %4 = vector.load %arg3[%c0_3, %c0_4] : memref<36x128xf32, #tpu.memory_space<vmem>>, vector<36x128xf32>
    %c0_5 = arith.constant 0 : index
    %c0_6 = arith.constant 0 : index
    %c0_7 = arith.constant 0 : index
    %c0_8 = arith.constant 0 : index
    %5 = vector.load %arg2[%c0_5, %c0_6, %c0_7, %c0_8] : memref<1x18x18x4xf32, #tpu.memory_space<vmem>>, vector<1x16x16x4xf32>
    %6 = vector.shape_cast %5 : vector<1x16x16x4xf32> to vector<16x16x4xf32>
    %7 = vector.shape_cast %6 : vector<16x16x4xf32> to vector<256x4xf32>
    %c0_9 = arith.constant 0 : index
    %c0_10 = arith.constant 0 : index
    %c1 = arith.constant 1 : index
    %c0_11 = arith.constant 0 : index
    %8 = vector.load %arg2[%c0_9, %c0_10, %c1, %c0_11] : memref<1x18x18x4xf32, #tpu.memory_space<vmem>>, vector<1x16x16x4xf32>
    %9 = vector.shape_cast %8 : vector<1x16x16x4xf32> to vector<16x16x4xf32>
    %10 = vector.shape_cast %9 : vector<16x16x4xf32> to vector<256x4xf32>
    %c0_12 = arith.constant 0 : index
    %c0_13 = arith.constant 0 : index
    %c2 = arith.constant 2 : index
    %c0_14 = arith.constant 0 : index
    %11 = vector.load %arg2[%c0_12, %c0_13, %c2, %c0_14] : memref<1x18x18x4xf32, #tpu.memory_space<vmem>>, vector<1x16x16x4xf32>
    %12 = vector.shape_cast %11 : vector<1x16x16x4xf32> to vector<16x16x4xf32>
    %13 = vector.shape_cast %12 : vector<16x16x4xf32> to vector<256x4xf32>
    %c0_15 = arith.constant 0 : index
    %c1_16 = arith.constant 1 : index
    %c0_17 = arith.constant 0 : index
    %c0_18 = arith.constant 0 : index
    %14 = vector.load %arg2[%c0_15, %c1_16, %c0_17, %c0_18] : memref<1x18x18x4xf32, #tpu.memory_space<vmem>>, vector<1x16x16x4xf32>
    %15 = vector.shape_cast %14 : vector<1x16x16x4xf32> to vector<16x16x4xf32>
    %16 = vector.shape_cast %15 : vector<16x16x4xf32> to vector<256x4xf32>
    %c0_19 = arith.constant 0 : index
    %c1_20 = arith.constant 1 : index
    %c1_21 = arith.constant 1 : index
    %c0_22 = arith.constant 0 : index
    %17 = vector.load %arg2[%c0_19, %c1_20, %c1_21, %c0_22] : memref<1x18x18x4xf32, #tpu.memory_space<vmem>>, vector<1x16x16x4xf32>
    %18 = vector.shape_cast %17 : vector<1x16x16x4xf32> to vector<16x16x4xf32>
    %19 = vector.shape_cast %18 : vector<16x16x4xf32> to vector<256x4xf32>
    %c0_23 = arith.constant 0 : index
    %c1_24 = arith.constant 1 : index
    %c2_25 = arith.constant 2 : index
    %c0_26 = arith.constant 0 : index
    %20 = vector.load %arg2[%c0_23, %c1_24, %c2_25, %c0_26] : memref<1x18x18x4xf32, #tpu.memory_space<vmem>>, vector<1x16x16x4xf32>
    %21 = vector.shape_cast %20 : vector<1x16x16x4xf32> to vector<16x16x4xf32>
    %22 = vector.shape_cast %21 : vector<16x16x4xf32> to vector<256x4xf32>
    %c0_27 = arith.constant 0 : index
    %c2_28 = arith.constant 2 : index
    %c0_29 = arith.constant 0 : index
    %c0_30 = arith.constant 0 : index
    %23 = vector.load %arg2[%c0_27, %c2_28, %c0_29, %c0_30] : memref<1x18x18x4xf32, #tpu.memory_space<vmem>>, vector<1x16x16x4xf32>
    %24 = vector.shape_cast %23 : vector<1x16x16x4xf32> to vector<16x16x4xf32>
    %25 = vector.shape_cast %24 : vector<16x16x4xf32> to vector<256x4xf32>
    %c0_31 = arith.constant 0 : index
    %c2_32 = arith.constant 2 : index
    %c1_33 = arith.constant 1 : index
    %c0_34 = arith.constant 0 : index
    %26 = vector.load %arg2[%c0_31, %c2_32, %c1_33, %c0_34] : memref<1x18x18x4xf32, #tpu.memory_space<vmem>>, vector<1x16x16x4xf32>
    %27 = vector.shape_cast %26 : vector<1x16x16x4xf32> to vector<16x16x4xf32>
    %28 = vector.shape_cast %27 : vector<16x16x4xf32> to vector<256x4xf32>
    %c0_35 = arith.constant 0 : index
    %c2_36 = arith.constant 2 : index
    %c2_37 = arith.constant 2 : index
    %c0_38 = arith.constant 0 : index
    %29 = vector.load %arg2[%c0_35, %c2_36, %c2_37, %c0_38] : memref<1x18x18x4xf32, #tpu.memory_space<vmem>>, vector<1x16x16x4xf32>
    %30 = vector.shape_cast %29 : vector<1x16x16x4xf32> to vector<16x16x4xf32>
    %31 = vector.shape_cast %30 : vector<16x16x4xf32> to vector<256x4xf32>
    %32 = tpu.concatenate %7, %10, %13, %16, %19, %22, %25, %28, %31 in 1 : vector<256x4xf32>, vector<256x4xf32>, vector<256x4xf32>, vector<256x4xf32>, vector<256x4xf32>, vector<256x4xf32>, vector<256x4xf32>, vector<256x4xf32>, vector<256x4xf32> -> vector<256x36xf32>
    %cst = arith.constant dense<0.000000e+00> : vector<256x128xf32>
    %33 = tpu.matmul %32, %4, %cst {dimension_numbers = #tpu.dot_dimension_numbers<[1], [0], [0], [1], [0, 0, 1, 1], [], []>} : vector<256x36xf32>, vector<36x128xf32>, vector<256x128xf32> -> vector<256x128xf32>
    %34 = vector.shape_cast %1 : vector<128xf32> to vector<1x128xf32>
    %35 = vector.broadcast %34 : vector<1x128xf32> to vector<256x128xf32>
    %36 = arith.mulf %33, %35 : vector<256x128xf32>
    %37 = vector.shape_cast %3 : vector<128xf32> to vector<1x128xf32>
    %38 = vector.broadcast %37 : vector<1x128xf32> to vector<256x128xf32>
    %39 = arith.addf %36, %38 : vector<256x128xf32>
    %40 = arith.negf %39 : vector<256x128xf32>
    %41 = math.exp %40 : vector<256x128xf32>
    %cst_39 = arith.constant 1.000000e+00 : f32
    %42 = vector.broadcast %cst_39 : f32 to vector<256x128xf32>
    %43 = arith.addf %42, %41 : vector<256x128xf32>
    %44 = arith.divf %42, %43 : vector<256x128xf32>
    %45 = arith.mulf %39, %44 : vector<256x128xf32>
    %c0_40 = arith.constant 0 : index
    %c0_41 = arith.constant 0 : index
    %c0_42 = arith.constant 0 : index
    %46 = vector.load %arg6[%c0_40, %c0_41, %c0_42] : memref<1x256x128xf32, #tpu.memory_space<vmem>>, vector<1x256x128xf32>
    %47 = vector.shape_cast %46 : vector<1x256x128xf32> to vector<256x128xf32>
    %48 = vector.shape_cast %45 : vector<256x128xf32> to vector<1x256x128xf32>
    tpu.vector_store %arg6[%c0_40, %c0_41, %c0_42], %48 {strides = array<i32>} : memref<1x256x128xf32, #tpu.memory_space<vmem>>, vector<1x256x128xf32>,
    return
  }
  func.func @transform_0(%arg0: i32, %arg1: i32) -> (i32, i32, i32, i32) {
    %c0_i32 = arith.constant 0 : i32
    %c0_i32_0 = arith.constant 0 : i32
    %c0_i32_1 = arith.constant 0 : i32
    %c0_i32_2 = arith.constant 0 : i32
    return %arg0, %c0_i32, %c0_i32_0, %c0_i32_1 : i32, i32, i32, i32
  }
  func.func @transform_1(%arg0: i32, %arg1: i32) -> (i32, i32) {
    %c0_i32 = arith.constant 0 : i32
    %c0_i32_0 = arith.constant 0 : i32
    return %c0_i32, %arg1 : i32, i32
  }
  func.func @transform_2(%arg0: i32, %arg1: i32) -> (i32, i32) {
    %c0_i32 = arith.constant 0 : i32
    %c0_i32_0 = arith.constant 0 : i32
    return %c0_i32, %arg1 : i32, i32
  }
  func.func @transform_3(%arg0: i32, %arg1: i32) -> (i32, i32) {
    %c0_i32 = arith.constant 0 : i32
    %c0_i32_0 = arith.constant 0 : i32
    return %c0_i32, %arg1 : i32, i32
  }
  func.func @transform_4(%arg0: i32, %arg1: i32) -> (i32, i32, i32) {
    %c0_i32 = arith.constant 0 : i32
    %c0_i32_0 = arith.constant 0 : i32
    return %arg0, %c0_i32, %arg1 : i32, i32, i32
  }
}

</mosaic_0001>

<llo_original>
// kernel: tpu_custom_call.1
$region0: #{tpu_custom_call.1}
  #allocation0 [shape = 'u32[]', space=smem, size = 0x4, offset = 0x4, fixed_abs, tag = 'smem constant byte address 0x4 - core index']
  #allocation1 [shape = 'u32[144,128]{1,0:T(1,128)}', space=vmem, size = 0x12000, scoped, tag = 'internal scratch']
  %s0 = inlined_call_operand.vmem [shape: f32[2,18,18,4], index: 0, kind: input, shape index: {}]
  %s1 = inlined_call_operand.vmem [shape: f32[36,128], index: 1, kind: input, shape index: {}]
  %s2 = inlined_call_operand.vmem [shape: f32[1,128], index: 2, kind: input, shape index: {}]
  %s3 = inlined_call_operand.vmem [shape: f32[1,128], index: 3, kind: input, shape index: {}]
  %s4 = inlined_call_operand.hbm [shape: f32[2,256,128], index: 4, kind: output, shape index: {}]
  %s5 = sld [smem:[#allocation0]]
  $region49: #{tpu_custom_call.1} parent=0
    _
  %s7 = ssub.s32 1, %s5
  %s8 = scalar_select 0, %s7, %s5
  $region1: #{tpu_custom_call.1} parent=0
    #allocation2 [shape = 'u8[262144]{0}', space=vmem, size = 0x40000, scoped, tag = 'output window, operand 0']
    #allocation3 [shape = 's32[2]{0}', space=sflag, size = 0x8, scoped, tag = 'scoped memory for tpu_custom_call.1']
    %9 = vsyncpa [#allocation3], 0
    %s10 = scalar_lea.sflag [#allocation3], 1
    %11 = vsyncpa %s10, 0
    loop: start=0, step=1, limit=4
    $region2: #{tpu_custom_call.1} parent=1 // loop_pre_header
      _
    $region3: #{tpu_custom_call.1} parent=1 // loop_header
      %s13 = sphi 0, %s17
      %p14 = scmp.ge.s32.totalorder %s13, 4
      %s20 = sphi 0, %s32
      %s21 = sphi 0, %s28
      %s22 = sphi 0, %s20
      %s23 = sphi 0, %s21
      %s24 = sphi 0, %s22
      %s25 = sphi 0, %s23
      %s35 = sphi 0, %s37
      %s38 = sphi 0, %s35
      %s39 = sphi 0, %s38
      %s55 = sphi 0, %s39
      %s61 = sphi 0, %s63
      %s64 = sphi 0, %s61
      %s65 = sphi 0, %s64
      %s81 = sphi 0, %s65
      %s87 = sphi 0, %s89
      %s90 = sphi 0, %s87
      %s91 = sphi 0, %s90
      %s107 = sphi 0, %s91
      %s113 = sphi 0, %s115
      %s116 = sphi 0, %s113
      %s117 = sphi 0, %s116
      %s133 = sphi 0, %s117
      %s141 = sphi 0, %s143
      %s144 = sphi 0, %s141
      %s145 = sphi 0, %s144
      %s161 = sphi 0, %s145
    $region4: #{tpu_custom_call.1} parent=1 // loop_header_branch
      %16 = sbr.rel (%p14) target = $region8
    $region5: #{tpu_custom_call.1} parent=1 // loop_body
      %s18 = ssub.s32 %s13, 1
      %s19 = ssub.s32 %s13, 2
      %s26 = sadd.s32 1, %s21
      %p27 = scmp.ge.s32.totalorder %s26, 1
      %s28 = scalar_select %p27, 0, %s26
      %s29 = sadd.s32 1, %s20
      %s30 = scalar_select %p27, %s29, %s20
      %p31 = scmp.ge.s32.totalorder %s30, 2
      %s32 = scalar_select %p31, 0, %s30
      %s33 = ssub.s32 %s20, %s32
      %p34 = scmp.eq.s32.totalorder %s33, 0
      %s36 = sadd.s32 %s35, 1
      %s37 = scalar_select %p34, %s35, %s36
      %p40 = pneg %p34
      %p41 = scmp.eq.s32.totalorder %s13, 1
      %p42 = por %p40, %p41
      %p43 = scmp.ne.s32.totalorder %s35, %s38
      %p44 = scmp.eq.s32.totalorder %s13, 0
      %p45 = por %p43, %p44
      %p46 = scmp.ne.s32.totalorder %s35, %s38
      %p47 = scmp.eq.s32.totalorder %s18, 1
      %p48 = por %p46, %p47
      %p49 = scmp.ne.s32.totalorder %s38, %s39
      %p50 = scmp.eq.s32.totalorder %s18, 0
      %p51 = por %p49, %p50
      %p52 = scmp.ne.s32.totalorder %s38, %s39
      %p53 = scmp.eq.s32.totalorder %s19, 1
      %p54 = por %p52, %p53
      %p56 = scmp.ne.s32.totalorder %s39, %s55
      %p57 = scmp.eq.s32.totalorder %s19, 0
      %p58 = por %p56, %p57
      %s59 = ssub.s32 %s21, %s28
      %p60 = scmp.eq.s32.totalorder %s59, 0
      %s62 = sadd.s32 %s61, 1
      %s63 = scalar_select %p60, %s61, %s62
      %p66 = pneg %p60
      %p67 = scmp.eq.s32.totalorder %s13, 1
      %p68 = por %p66, %p67
      %p69 = scmp.ne.s32.totalorder %s61, %s64
      %p70 = scmp.eq.s32.totalorder %s13, 0
      %p71 = por %p69, %p70
      %p72 = scmp.ne.s32.totalorder %s61, %s64
      %p73 = scmp.eq.s32.totalorder %s18, 1
      %p74 = por %p72, %p73
      %p75 = scmp.ne.s32.totalorder %s64, %s65
      %p76 = scmp.eq.s32.totalorder %s18, 0
      %p77 = por %p75, %p76
      %p78 = scmp.ne.s32.totalorder %s64, %s65
      %p79 = scmp.eq.s32.totalorder %s19, 1
      %p80 = por %p78, %p79
      %p82 = scmp.ne.s32.totalorder %s65, %s81
      %p83 = scmp.eq.s32.totalorder %s19, 0
      %p84 = por %p82, %p83
      %s85 = ssub.s32 %s21, %s28
      %p86 = scmp.eq.s32.totalorder %s85, 0
      %s88 = sadd.s32 %s87, 1
      %s89 = scalar_select %p86, %s87, %s88
      %p92 = pneg %p86
      %p93 = scmp.eq.s32.totalorder %s13, 1
      %p94 = por %p92, %p93
      %p95 = scmp.ne.s32.totalorder %s87, %s90
      %p96 = scmp.eq.s32.totalorder %s13, 0
      %p97 = por %p95, %p96
      %p98 = scmp.ne.s32.totalorder %s87, %s90
      %p99 = scmp.eq.s32.totalorder %s18, 1
      %p100 = por %p98, %p99
      %p101 = scmp.ne.s32.totalorder %s90, %s91
      %p102 = scmp.eq.s32.totalorder %s18, 0
      %p103 = por %p101, %p102
      %p104 = scmp.ne.s32.totalorder %s90, %s91
      %p105 = scmp.eq.s32.totalorder %s19, 1
      %p106 = por %p104, %p105
      %p108 = scmp.ne.s32.totalorder %s91, %s107
      %p109 = scmp.eq.s32.totalorder %s19, 0
      %p110 = por %p108, %p109
      %s111 = ssub.s32 %s21, %s28
      %p112 = scmp.eq.s32.totalorder %s111, 0
      %s114 = sadd.s32 %s113, 1
      %s115 = scalar_select %p112, %s113, %s114
      %p118 = pneg %p112
      %p119 = scmp.eq.s32.totalorder %s13, 1
      %p120 = por %p118, %p119
      %p121 = scmp.ne.s32.totalorder %s113, %s116
      %p122 = scmp.eq.s32.totalorder %s13, 0
      %p123 = por %p121, %p122
      %p124 = scmp.ne.s32.totalorder %s113, %s116
      %p125 = scmp.eq.s32.totalorder %s18, 1
      %p126 = por %p124, %p125
      %p127 = scmp.ne.s32.totalorder %s116, %s117
      %p128 = scmp.eq.s32.totalorder %s18, 0
      %p129 = por %p127, %p128
      %p130 = scmp.ne.s32.totalorder %s116, %s117
      %p131 = scmp.eq.s32.totalorder %s19, 1
      %p132 = por %p130, %p131
      %p134 = scmp.ne.s32.totalorder %s117, %s133
      %p135 = scmp.eq.s32.totalorder %s19, 0
      %p136 = por %p134, %p135
      %s137 = ssub.s32 %s20, %s32
      %s138 = ssub.s32 %s21, %s28
      %s139 = sor.u32 %s137, %s138
      %p140 = scmp.eq.s32.totalorder %s139, 0
      %s142 = sadd.s32 %s141, 1
      %s143 = scalar_select %p140, %s141, %s142
      %p146 = pneg %p140
      %p147 = scmp.eq.s32.totalorder %s13, 1
      %p148 = por %p146, %p147
      %p149 = scmp.ne.s32.totalorder %s141, %s144
      %p150 = scmp.eq.s32.totalorder %s13, 0
      %p151 = por %p149, %p150
      %p152 = scmp.ne.s32.totalorder %s141, %s144
      %p153 = scmp.eq.s32.totalorder %s18, 1
      %p154 = por %p152, %p153
      %p155 = scmp.ne.s32.totalorder %s144, %s145
      %p156 = scmp.eq.s32.totalorder %s18, 0
      %p157 = por %p155, %p156
      %p158 = scmp.ne.s32.totalorder %s144, %s145
      %p159 = scmp.eq.s32.totalorder %s19, 1
      %p160 = por %p158, %p159
      %p162 = scmp.ne.s32.totalorder %s145, %s161
      %p163 = scmp.eq.s32.totalorder %s19, 0
      %p164 = por %p162, %p163
      %p165 = scmp.le.s32.totalorder 1, %s13
      %p166 = scmp.lt.s32.totalorder %s13, 3
      %p167 = pnand %p165, %p166
      %p168 = pneg %p167
      // Predicated region
      $region9: #{tpu_custom_call.1} parent=5 // pred_check
        _
      $region10: #{tpu_custom_call.1} parent=5 // pred_check_branch
        %170 = sbr.rel (%p167) target = $region12
      $region11: #{tpu_custom_call.1} parent=5 // pred_region
        %s171 = ssub.s32 %s13, 1
        // Predicated region
        $region13: #{tpu_custom_call.1} parent=11 // pred_check
          %p172 = pneg %p77
        $region14: #{tpu_custom_call.1} parent=11 // pred_check_branch
          %174 = sbr.rel (%p172) target = $region16
        $region15: #{tpu_custom_call.1} parent=11 // pred_region
          %p175 = scmp.lt.s32.totalorder %s23, 0
          %s176 = scalar_select %p175, %s23, 0
          %s177 = smul.addr %s176, 8
          %s178 = scalar_lea.vmem %s1, %s177
        $region16: #{tpu_custom_call.1} parent=11 // pred_fallthru
          _
        // Predicated region
        $region17: #{tpu_custom_call.1} parent=11 // pred_check
          %p179 = pneg %p103
        $region18: #{tpu_custom_call.1} parent=11 // pred_check_branch
          %181 = sbr.rel (%p179) target = $region20
        $region19: #{tpu_custom_call.1} parent=11 // pred_region
          %p182 = scmp.lt.s32.totalorder %s23, 0
          %s183 = scalar_select %p182, %s23, 0
          %s184 = scalar_lea.vmem %s2, %s183
        $region20: #{tpu_custom_call.1} parent=11 // pred_fallthru
          _
        // Predicated region
        $region21: #{tpu_custom_call.1} parent=11 // pred_check
          %p185 = pneg %p129
        $region22: #{tpu_custom_call.1} parent=11 // pred_check_branch
          %187 = sbr.rel (%p185) target = $region24
        $region23: #{tpu_custom_call.1} parent=11 // pred_region
          %p188 = scmp.lt.s32.totalorder %s23, 0
          %s189 = scalar_select %p188, %s23, 0
          %s190 = scalar_lea.vmem %s3, %s189
        $region24: #{tpu_custom_call.1} parent=11 // pred_fallthru
          _
      $region12: #{tpu_custom_call.1} parent=5 // pred_fallthru
        _
      %p191 = scmp.lt.s32.totalorder %s13, 2
      // Predicated region
      $region25: #{tpu_custom_call.1} parent=5 // pred_check
        %p192 = pneg %p191
      $region26: #{tpu_custom_call.1} parent=5 // pred_check_branch
        %194 = sbr.rel (%p192) target = $region28
      $region27: #{tpu_custom_call.1} parent=5 // pred_region
        // Predicated region
        $region29: #{tpu_custom_call.1} parent=27 // pred_check
          %p195 = pneg %p45
        $region30: #{tpu_custom_call.1} parent=27 // pred_check_branch
          %197 = sbr.rel (%p195) target = $region32
        $region31: #{tpu_custom_call.1} parent=27 // pred_region
          %p198 = scmp.lt.s32.totalorder %s20, 1
          %s199 = scalar_select %p198, %s20, 1
          %s200 = smul.addr %s199, 54
          %s201 = smul.addr %s200, 8
          %s202 = scalar_lea.vmem %s0, %s201
        $region32: #{tpu_custom_call.1} parent=27 // pred_fallthru
          _
      $region28: #{tpu_custom_call.1} parent=5 // pred_fallthru
        _
      %p203 = scmp.le.s32.totalorder 1, %s13
      %p204 = scmp.lt.s32.totalorder %s13, 3
      %p205 = pnand %p203, %p204
      %p206 = pneg %p205
      // Predicated region
      $region33: #{tpu_custom_call.1} parent=5 // pred_check
        _
      $region34: #{tpu_custom_call.1} parent=5 // pred_check_branch
        %208 = sbr.rel (%p205) target = $region36
      $region35: #{tpu_custom_call.1} parent=5 // pred_region
        %s209 = ssub.s32 %s13, 1
        %p210 = scmp.lt.s32.totalorder %s22, 1
        %s211 = scalar_select %p210, %s22, 1
        %s212 = smul.addr %s211, 54
        %s213 = smul.addr %s212, 8
        %s214 = scalar_lea.vmem %s0, %s213
        %p215 = pneg %p51
        %p216 = pneg %p48
        %p217 = scmp.lt.s32.totalorder %s23, 0
        %s218 = scalar_select %p217, %s23, 0
        %s219 = smul.addr %s218, 8
        %s220 = scalar_lea.vmem %s1, %s219
        %p221 = pneg %p77
        %p222 = pneg %p74
        %p223 = scmp.lt.s32.totalorder %s23, 0
        %s224 = scalar_select %p223, %s23, 0
        %s225 = scalar_lea.vmem %s2, %s224
        %p226 = pneg %p103
        %p227 = pneg %p100
        %p228 = scmp.lt.s32.totalorder %s23, 0
        %s229 = scalar_select %p228, %s23, 0
        %s230 = scalar_lea.vmem %s3, %s229
        %p231 = pneg %p129
        %p232 = pneg %p126
        %p233 = pneg %p157
        %p234 = pneg %p154
        %s235 = sand.u32 %s144, 1
        %s236 = scalar_lea.sflag [#allocation3], %s235
        %s237 = sand.u32 %s144, 1
        %s238 = smul.addr %s237, 256
        %s239 = scalar_lea.vmem [#allocation2], %s238
        %p240 = scmp.lt.s32.totalorder %s22, 1
        %s241 = scalar_select %p240, %s22, 1
        %s242 = smul.addr %s241, 54
        %s243 = smul.addr %s242, 8
        %s244 = scalar_lea.vmem %s0, %s243
        %p245 = scmp.lt.s32.totalorder %s23, 0
        %s246 = scalar_select %p245, %s23, 0
        %s247 = smul.addr %s246, 8
        %s248 = scalar_lea.vmem %s1, %s247
        %p249 = scmp.lt.s32.totalorder %s23, 0
        %s250 = scalar_select %p249, %s23, 0
        %s251 = scalar_lea.vmem %s2, %s250
        %p252 = scmp.lt.s32.totalorder %s23, 0
        %s253 = scalar_select %p252, %s23, 0
        %s254 = scalar_lea.vmem %s3, %s253
        %v255 = vld [vmem:[%s251] sm:$0x1]
        %v256 = vld [vmem:[%s254] sm:$0x1]
        %v257 = vld [vmem:[%s248] sm:$0xff]
        %v258 = vld [vmem:[%s248 + $0x8] sm:$0xff]
        %v259 = vld [vmem:[%s248 + $0x10] sm:$0xff]
        %v260 = vld [vmem:[%s248 + $0x18] sm:$0xff]
        %v261 = vld [vmem:[%s248 + $0x20] sm:$0xf]
        %v262 = vld [vmem:[%s244] sm:$0xff]
        %v263 = vld [vmem:[%s244 + $0x8] sm:$0xff]
        %v264 = vld [vmem:[%s244 + $0x18] sm:$0xff]
        %v265 = vld [vmem:[%s244 + $0x20] sm:$0xff]
        %v266 = vld [vmem:[%s244 + $0x30] sm:$0xff]
        %v267 = vld [vmem:[%s244 + $0x38] sm:$0xff]
        %v268 = vld [vmem:[%s244 + $0x48] sm:$0xff]
        %v269 = vld [vmem:[%s244 + $0x50] sm:$0xff]
        %v270 = vld [vmem:[%s244 + $0x60] sm:$0xff]
        %v271 = vld [vmem:[%s244 + $0x68] sm:$0xff]
        %v272 = vld [vmem:[%s244 + $0x78] sm:$0xff]
        %v273 = vld [vmem:[%s244 + $0x80] sm:$0xff]
        %v274 = vld [vmem:[%s244 + $0x90] sm:$0xff]
        %v275 = vld [vmem:[%s244 + $0x98] sm:$0xff]
        %v276 = vld [vmem:[%s244 + $0xa8] sm:$0xff]
        %v277 = vld [vmem:[%s244 + $0xb0] sm:$0xff]
        %v278 = vld [vmem:[%s244 + $0xc0] sm:$0xff]
        %v279 = vld [vmem:[%s244 + $0xc8] sm:$0xff]
        %v280 = vld [vmem:[%s244 + $0xd8] sm:$0xff]
        %v281 = vld [vmem:[%s244 + $0xe0] sm:$0xff]
        %v282 = vld [vmem:[%s244 + $0xf0] sm:$0xff]
        %v283 = vld [vmem:[%s244 + $0xf8] sm:$0xff]
        %v284 = vld [vmem:[%s244 + $0x108] sm:$0xff]
        %v285 = vld [vmem:[%s244 + $0x110] sm:$0xff]
        %v286 = vld [vmem:[%s244 + $0x120] sm:$0xff]
        %v287 = vld [vmem:[%s244 + $0x128] sm:$0xff]
        %v288 = vld [vmem:[%s244 + $0x138] sm:$0xff]
        %v289 = vld [vmem:[%s244 + $0x140] sm:$0xff]
        %v290 = vld [vmem:[%s244 + $0x150] sm:$0xff]
        %v291 = vld [vmem:[%s244 + $0x158] sm:$0xff]
        %v292 = vld [vmem:[%s244 + $0x168] sm:$0xff]
        %v293 = vld [vmem:[%s244 + $0x170] sm:$0xff]
        %v294 = vld [vmem:[%s244 + $0x1] sm:$0xff]
        %v295 = vld [vmem:[%s244 + $0x9] sm:$0xff]
        %v296 = vld [vmem:[%s244 + $0x19] sm:$0xff]
        %v297 = vld [vmem:[%s244 + $0x21] sm:$0xff]
        %v298 = vld [vmem:[%s244 + $0x31] sm:$0xff]
        %v299 = vld [vmem:[%s244 + $0x39] sm:$0xff]
        %v300 = vld [vmem:[%s244 + $0x49] sm:$0xff]
        %v301 = vld [vmem:[%s244 + $0x51] sm:$0xff]
        %v302 = vld [vmem:[%s244 + $0x61] sm:$0xff]
        %v303 = vld [vmem:[%s244 + $0x69] sm:$0xff]
        %v304 = vld [vmem:[%s244 + $0x79] sm:$0xff]
        %v305 = vld [vmem:[%s244 + $0x81] sm:$0xff]
        %v306 = vld [vmem:[%s244 + $0x91] sm:$0xff]
        %v307 = vld [vmem:[%s244 + $0x99] sm:$0xff]
        %v308 = vld [vmem:[%s244 + $0xa9] sm:$0xff]
        %v309 = vld [vmem:[%s244 + $0xb1] sm:$0xff]
        %v310 = vld [vmem:[%s244 + $0xc1] sm:$0xff]
        %v311 = vld [vmem:[%s244 + $0xc9] sm:$0xff]
        %v312 = vld [vmem:[%s244 + $0xd9] sm:$0xff]
        %v313 = vld [vmem:[%s244 + $0xe1] sm:$0xff]
        %v314 = vld [vmem:[%s244 + $0xf1] sm:$0xff]
        %v315 = vld [vmem:[%s244 + $0xf9] sm:$0xff]
        %v316 = vld [vmem:[%s244 + $0x109] sm:$0xff]
        %v317 = vld [vmem:[%s244 + $0x111] sm:$0xff]
        %v318 = vld [vmem:[%s244 + $0x121] sm:$0xff]
        %v319 = vld [vmem:[%s244 + $0x129] sm:$0xff]
        %v320 = vld [vmem:[%s244 + $0x139] sm:$0xff]
        %v321 = vld [vmem:[%s244 + $0x141] sm:$0xff]
        %v322 = vld [vmem:[%s244 + $0x151] sm:$0xff]
        %v323 = vld [vmem:[%s244 + $0x159] sm:$0xff]
        %v324 = vld [vmem:[%s244 + $0x169] sm:$0xff]
        %v325 = vld [vmem:[%s244 + $0x171] sm:$0xff]
        %v326 = vld [vmem:[%s244 + $0x2] sm:$0xff]
        %v327 = vld [vmem:[%s244 + $0xa] sm:$0xff]
        %v328 = vld [vmem:[%s244 + $0x1a] sm:$0xff]
        %v329 = vld [vmem:[%s244 + $0x22] sm:$0xff]
        %v330 = vld [vmem:[%s244 + $0x32] sm:$0xff]
        %v331 = vld [vmem:[%s244 + $0x3a] sm:$0xff]
        %v332 = vld [vmem:[%s244 + $0x4a] sm:$0xff]
        %v333 = vld [vmem:[%s244 + $0x52] sm:$0xff]
        %v334 = vld [vmem:[%s244 + $0x62] sm:$0xff]
        %v335 = vld [vmem:[%s244 + $0x6a] sm:$0xff]
        %v336 = vld [vmem:[%s244 + $0x7a] sm:$0xff]
        %v337 = vld [vmem:[%s244 + $0x82] sm:$0xff]
        %v338 = vld [vmem:[%s244 + $0x92] sm:$0xff]
        %v339 = vld [vmem:[%s244 + $0x9a] sm:$0xff]
        %v340 = vld [vmem:[%s244 + $0xaa] sm:$0xff]
        %v341 = vld [vmem:[%s244 + $0xb2] sm:$0xff]
        %v342 = vld [vmem:[%s244 + $0xc2] sm:$0xff]
        %v343 = vld [vmem:[%s244 + $0xca] sm:$0xff]
        %v344 = vld [vmem:[%s244 + $0xda] sm:$0xff]
        %v345 = vld [vmem:[%s244 + $0xe2] sm:$0xff]
        %v346 = vld [vmem:[%s244 + $0xf2] sm:$0xff]
        %v347 = vld [vmem:[%s244 + $0xfa] sm:$0xff]
        %v348 = vld [vmem:[%s244 + $0x10a] sm:$0xff]
        %v349 = vld [vmem:[%s244 + $0x112] sm:$0xff]
        %v350 = vld [vmem:[%s244 + $0x122] sm:$0xff]
        %v351 = vld [vmem:[%s244 + $0x12a] sm:$0xff]
        %v352 = vld [vmem:[%s244 + $0x13a] sm:$0xff]
        %v353 = vld [vmem:[%s244 + $0x142] sm:$0xff]
        %v354 = vld [vmem:[%s244 + $0x152] sm:$0xff]
        %v355 = vld [vmem:[%s244 + $0x15a] sm:$0xff]
        %v356 = vld [vmem:[%s244 + $0x16a] sm:$0xff]
        %v357 = vld [vmem:[%s244 + $0x172] sm:$0xff]
        %s358 = scalar_lea.vmem %s244, 24
        %v359 = vld [vmem:[%s358] sm:$0xff]
        %v360 = vld [vmem:[%s358 + $0x8] sm:$0xff]
        %v361 = vld [vmem:[%s358 + $0x18] sm:$0xff]
        %v362 = vld [vmem:[%s358 + $0x20] sm:$0xff]
        %v363 = vld [vmem:[%s358 + $0x30] sm:$0xff]
        %v364 = vld [vmem:[%s358 + $0x38] sm:$0xff]
        %v365 = vld [vmem:[%s358 + $0x48] sm:$0xff]
        %v366 = vld [vmem:[%s358 + $0x50] sm:$0xff]
        %v367 = vld [vmem:[%s358 + $0x60] sm:$0xff]
        %v368 = vld [vmem:[%s358 + $0x68] sm:$0xff]
        %v369 = vld [vmem:[%s358 + $0x78] sm:$0xff]
        %v370 = vld [vmem:[%s358 + $0x80] sm:$0xff]
        %v371 = vld [vmem:[%s358 + $0x90] sm:$0xff]
        %v372 = vld [vmem:[%s358 + $0x98] sm:$0xff]
        %v373 = vld [vmem:[%s358 + $0xa8] sm:$0xff]
        %v374 = vld [vmem:[%s358 + $0xb0] sm:$0xff]
        %v375 = vld [vmem:[%s358 + $0xc0] sm:$0xff]
        %v376 = vld [vmem:[%s358 + $0xc8] sm:$0xff]
        %v377 = vld [vmem:[%s358 + $0xd8] sm:$0xff]
        %v378 = vld [vmem:[%s358 + $0xe0] sm:$0xff]
        %v379 = vld [vmem:[%s358 + $0xf0] sm:$0xff]
        %v380 = vld [vmem:[%s358 + $0xf8] sm:$0xff]
        %v381 = vld [vmem:[%s358 + $0x108] sm:$0xff]
        %v382 = vld [vmem:[%s358 + $0x110] sm:$0xff]
        %v383 = vld [vmem:[%s358 + $0x120] sm:$0xff]
        %v384 = vld [vmem:[%s358 + $0x128] sm:$0xff]
        %v385 = vld [vmem:[%s358 + $0x138] sm:$0xff]
        %v386 = vld [vmem:[%s358 + $0x140] sm:$0xff]
        %v387 = vld [vmem:[%s358 + $0x150] sm:$0xff]
        %v388 = vld [vmem:[%s358 + $0x158] sm:$0xff]
        %v389 = vld [vmem:[%s358 + $0x168] sm:$0xff]
        %v390 = vld [vmem:[%s358 + $0x170] sm:$0xff]
        %v391 = vld [vmem:[%s358 + $0x1] sm:$0xff]
        %v392 = vld [vmem:[%s358 + $0x9] sm:$0xff]
        %v393 = vld [vmem:[%s358 + $0x19] sm:$0xff]
        %v394 = vld [vmem:[%s358 + $0x21] sm:$0xff]
        %v395 = vld [vmem:[%s358 + $0x31] sm:$0xff]
        %v396 = vld [vmem:[%s358 + $0x39] sm:$0xff]
        %v397 = vld [vmem:[%s358 + $0x49] sm:$0xff]
        %v398 = vld [vmem:[%s358 + $0x51] sm:$0xff]
        %v399 = vld [vmem:[%s358 + $0x61] sm:$0xff]
        %v400 = vld [vmem:[%s358 + $0x69] sm:$0xff]
        %v401 = vld [vmem:[%s358 + $0x79] sm:$0xff]
        %v402 = vld [vmem:[%s358 + $0x81] sm:$0xff]
        %v403 = vld [vmem:[%s358 + $0x91] sm:$0xff]
        %v404 = vld [vmem:[%s358 + $0x99] sm:$0xff]
        %v405 = vld [vmem:[%s358 + $0xa9] sm:$0xff]
        %v406 = vld [vmem:[%s358 + $0xb1] sm:$0xff]
        %v407 = vld [vmem:[%s358 + $0xc1] sm:$0xff]
        %v408 = vld [vmem:[%s358 + $0xc9] sm:$0xff]
        %v409 = vld [vmem:[%s358 + $0xd9] sm:$0xff]
        %v410 = vld [vmem:[%s358 + $0xe1] sm:$0xff]
        %v411 = vld [vmem:[%s358 + $0xf1] sm:$0xff]
        %v412 = vld [vmem:[%s358 + $0xf9] sm:$0xff]
        %v413 = vld [vmem:[%s358 + $0x109] sm:$0xff]
        %v414 = vld [vmem:[%s358 + $0x111] sm:$0xff]
        %v415 = vld [vmem:[%s358 + $0x121] sm:$0xff]
        %v416 = vld [vmem:[%s358 + $0x129] sm:$0xff]
        %v417 = vld [vmem:[%s358 + $0x139] sm:$0xff]
        %v418 = vld [vmem:[%s358 + $0x141] sm:$0xff]
        %v419 = vld [vmem:[%s358 + $0x151] sm:$0xff]
        %v420 = vld [vmem:[%s358 + $0x159] sm:$0xff]
        %v421 = vld [vmem:[%s358 + $0x169] sm:$0xff]
        %v422 = vld [vmem:[%s358 + $0x171] sm:$0xff]
        %v423 = vld [vmem:[%s358 + $0x2] sm:$0xff]
        %v424 = vld [vmem:[%s358 + $0xa] sm:$0xff]
        %v425 = vld [vmem:[%s358 + $0x1a] sm:$0xff]
        %v426 = vld [vmem:[%s358 + $0x22] sm:$0xff]
        %v427 = vld [vmem:[%s358 + $0x32] sm:$0xff]
        %v428 = vld [vmem:[%s358 + $0x3a] sm:$0xff]
        %v429 = vld [vmem:[%s358 + $0x4a] sm:$0xff]
        %v430 = vld [vmem:[%s358 + $0x52] sm:$0xff]
        %v431 = vld [vmem:[%s358 + $0x62] sm:$0xff]
        %v432 = vld [vmem:[%s358 + $0x6a] sm:$0xff]
        %v433 = vld [vmem:[%s358 + $0x7a] sm:$0xff]
        %v434 = vld [vmem:[%s358 + $0x82] sm:$0xff]
        %v435 = vld [vmem:[%s358 + $0x92] sm:$0xff]
        %v436 = vld [vmem:[%s358 + $0x9a] sm:$0xff]
        %v437 = vld [vmem:[%s358 + $0xaa] sm:$0xff]
        %v438 = vld [vmem:[%s358 + $0xb2] sm:$0xff]
        %v439 = vld [vmem:[%s358 + $0xc2] sm:$0xff]
        %v440 = vld [vmem:[%s358 + $0xca] sm:$0xff]
        %v441 = vld [vmem:[%s358 + $0xda] sm:$0xff]
        %v442 = vld [vmem:[%s358 + $0xe2] sm:$0xff]
        %v443 = vld [vmem:[%s358 + $0xf2] sm:$0xff]
        %v444 = vld [vmem:[%s358 + $0xfa] sm:$0xff]
        %v445 = vld [vmem:[%s358 + $0x10a] sm:$0xff]
        %v446 = vld [vmem:[%s358 + $0x112] sm:$0xff]
        %v447 = vld [vmem:[%s358 + $0x122] sm:$0xff]
        %v448 = vld [vmem:[%s358 + $0x12a] sm:$0xff]
        %v449 = vld [vmem:[%s358 + $0x13a] sm:$0xff]
        %v450 = vld [vmem:[%s358 + $0x142] sm:$0xff]
        %v451 = vld [vmem:[%s358 + $0x152] sm:$0xff]
        %v452 = vld [vmem:[%s358 + $0x15a] sm:$0xff]
        %v453 = vld [vmem:[%s358 + $0x16a] sm:$0xff]
        %v454 = vld [vmem:[%s358 + $0x172] sm:$0xff]
        %s455 = scalar_lea.vmem %s244, 48
        %v456 = vld [vmem:[%s455] sm:$0xff]
        %v457 = vld [vmem:[%s455 + $0x8] sm:$0xff]
        %v458 = vld [vmem:[%s455 + $0x18] sm:$0xff]
        %v459 = vld [vmem:[%s455 + $0x20] sm:$0xff]
        %v460 = vld [vmem:[%s455 + $0x30] sm:$0xff]
        %v461 = vld [vmem:[%s455 + $0x38] sm:$0xff]
        %v462 = vld [vmem:[%s455 + $0x48] sm:$0xff]
        %v463 = vld [vmem:[%s455 + $0x50] sm:$0xff]
        %v464 = vld [vmem:[%s455 + $0x60] sm:$0xff]
        %v465 = vld [vmem:[%s455 + $0x68] sm:$0xff]
        %v466 = vld [vmem:[%s455 + $0x78] sm:$0xff]
        %v467 = vld [vmem:[%s455 + $0x80] sm:$0xff]
        %v468 = vld [vmem:[%s455 + $0x90] sm:$0xff]
        %v469 = vld [vmem:[%s455 + $0x98] sm:$0xff]
        %v470 = vld [vmem:[%s455 + $0xa8] sm:$0xff]
        %v471 = vld [vmem:[%s455 + $0xb0] sm:$0xff]
        %v472 = vld [vmem:[%s455 + $0xc0] sm:$0xff]
        %v473 = vld [vmem:[%s455 + $0xc8] sm:$0xff]
        %v474 = vld [vmem:[%s455 + $0xd8] sm:$0xff]
        %v475 = vld [vmem:[%s455 + $0xe0] sm:$0xff]
        %v476 = vld [vmem:[%s455 + $0xf0] sm:$0xff]
        %v477 = vld [vmem:[%s455 + $0xf8] sm:$0xff]
        %v478 = vld [vmem:[%s455 + $0x108] sm:$0xff]
        %v479 = vld [vmem:[%s455 + $0x110] sm:$0xff]
        %v480 = vld [vmem:[%s455 + $0x120] sm:$0xff]
        %v481 = vld [vmem:[%s455 + $0x128] sm:$0xff]
        %v482 = vld [vmem:[%s455 + $0x138] sm:$0xff]
        %v483 = vld [vmem:[%s455 + $0x140] sm:$0xff]
        %v484 = vld [vmem:[%s455 + $0x150] sm:$0xff]
        %v485 = vld [vmem:[%s455 + $0x158] sm:$0xff]
        %v486 = vld [vmem:[%s455 + $0x168] sm:$0xff]
        %v487 = vld [vmem:[%s455 + $0x170] sm:$0xff]
        %v488 = vld [vmem:[%s455 + $0x1] sm:$0xff]
        %v489 = vld [vmem:[%s455 + $0x9] sm:$0xff]
        %v490 = vld [vmem:[%s455 + $0x19] sm:$0xff]
        %v491 = vld [vmem:[%s455 + $0x21] sm:$0xff]
        %v492 = vld [vmem:[%s455 + $0x31] sm:$0xff]
        %v493 = vld [vmem:[%s455 + $0x39] sm:$0xff]
        %v494 = vld [vmem:[%s455 + $0x49] sm:$0xff]
        %v495 = vld [vmem:[%s455 + $0x51] sm:$0xff]
        %v496 = vld [vmem:[%s455 + $0x61] sm:$0xff]
        %v497 = vld [vmem:[%s455 + $0x69] sm:$0xff]
        %v498 = vld [vmem:[%s455 + $0x79] sm:$0xff]
        %v499 = vld [vmem:[%s455 + $0x81] sm:$0xff]
        %v500 = vld [vmem:[%s455 + $0x91] sm:$0xff]
        %v501 = vld [vmem:[%s455 + $0x99] sm:$0xff]
        %v502 = vld [vmem:[%s455 + $0xa9] sm:$0xff]
        %v503 = vld [vmem:[%s455 + $0xb1] sm:$0xff]
        %v504 = vld [vmem:[%s455 + $0xc1] sm:$0xff]
        %v505 = vld [vmem:[%s455 + $0xc9] sm:$0xff]
        %v506 = vld [vmem:[%s455 + $0xd9] sm:$0xff]
        %v507 = vld [vmem:[%s455 + $0xe1] sm:$0xff]
        %v508 = vld [vmem:[%s455 + $0xf1] sm:$0xff]
        %v509 = vld [vmem:[%s455 + $0xf9] sm:$0xff]
        %v510 = vld [vmem:[%s455 + $0x109] sm:$0xff]
        %v511 = vld [vmem:[%s455 + $0x111] sm:$0xff]
        %v512 = vld [vmem:[%s455 + $0x121] sm:$0xff]
        %v513 = vld [vmem:[%s455 + $0x129] sm:$0xff]
        %v514 = vld [vmem:[%s455 + $0x139] sm:$0xff]
        %v515 = vld [vmem:[%s455 + $0x141] sm:$0xff]
        %v516 = vld [vmem:[%s455 + $0x151] sm:$0xff]
        %v517 = vld [vmem:[%s455 + $0x159] sm:$0xff]
        %v518 = vld [vmem:[%s455 + $0x169] sm:$0xff]
        %v519 = vld [vmem:[%s455 + $0x171] sm:$0xff]
        %v520 = vld [vmem:[%s455 + $0x2] sm:$0xff]
        %v521 = vld [vmem:[%s455 + $0xa] sm:$0xff]
        %v522 = vld [vmem:[%s455 + $0x1a] sm:$0xff]
        %v523 = vld [vmem:[%s455 + $0x22] sm:$0xff]
        %v524 = vld [vmem:[%s455 + $0x32] sm:$0xff]
        %v525 = vld [vmem:[%s455 + $0x3a] sm:$0xff]
        %v526 = vld [vmem:[%s455 + $0x4a] sm:$0xff]
        %v527 = vld [vmem:[%s455 + $0x52] sm:$0xff]
        %v528 = vld [vmem:[%s455 + $0x62] sm:$0xff]
        %v529 = vld [vmem:[%s455 + $0x6a] sm:$0xff]
        %v530 = vld [vmem:[%s455 + $0x7a] sm:$0xff]
        %v531 = vld [vmem:[%s455 + $0x82] sm:$0xff]
        %v532 = vld [vmem:[%s455 + $0x92] sm:$0xff]
        %v533 = vld [vmem:[%s455 + $0x9a] sm:$0xff]
        %v534 = vld [vmem:[%s455 + $0xaa] sm:$0xff]
        %v535 = vld [vmem:[%s455 + $0xb2] sm:$0xff]
        %v536 = vld [vmem:[%s455 + $0xc2] sm:$0xff]
        %v537 = vld [vmem:[%s455 + $0xca] sm:$0xff]
        %v538 = vld [vmem:[%s455 + $0xda] sm:$0xff]
        %v539 = vld [vmem:[%s455 + $0xe2] sm:$0xff]
        %v540 = vld [vmem:[%s455 + $0xf2] sm:$0xff]
        %v541 = vld [vmem:[%s455 + $0xfa] sm:$0xff]
        %v542 = vld [vmem:[%s455 + $0x10a] sm:$0xff]
        %v543 = vld [vmem:[%s455 + $0x112] sm:$0xff]
        %v544 = vld [vmem:[%s455 + $0x122] sm:$0xff]
        %v545 = vld [vmem:[%s455 + $0x12a] sm:$0xff]
        %v546 = vld [vmem:[%s455 + $0x13a] sm:$0xff]
        %v547 = vld [vmem:[%s455 + $0x142] sm:$0xff]
        %v548 = vld [vmem:[%s455 + $0x152] sm:$0xff]
        %v549 = vld [vmem:[%s455 + $0x15a] sm:$0xff]
        %v550 = vld [vmem:[%s455 + $0x16a] sm:$0xff]
        %v551 = vld [vmem:[%s455 + $0x172] sm:$0xff]
        %584 = vrot.lane.b32.xlu0 %v294, 4
        %v585 = vpop.permute.xlu0 %584
        %586 = vrot.lane.b32.xlu0 %v295, 4
        %v587 = vpop.permute.xlu0 %586
        %588 = vrot.lane.b32.xlu0 %v296, 4
        %v589 = vpop.permute.xlu0 %588
        %590 = vrot.lane.b32.xlu0 %v297, 4
        %v591 = vpop.permute.xlu0 %590
        %592 = vrot.lane.b32.xlu0 %v298, 4
        %v593 = vpop.permute.xlu0 %592
        %594 = vrot.lane.b32.xlu0 %v299, 4
        %v595 = vpop.permute.xlu0 %594
        %596 = vrot.lane.b32.xlu0 %v300, 4
        %v597 = vpop.permute.xlu0 %596
        %598 = vrot.lane.b32.xlu0 %v301, 4
        %v599 = vpop.permute.xlu0 %598
        %600 = vrot.lane.b32.xlu0 %v302, 4
        %v601 = vpop.permute.xlu0 %600
        %602 = vrot.lane.b32.xlu0 %v303, 4
        %v603 = vpop.permute.xlu0 %602
        %604 = vrot.lane.b32.xlu0 %v304, 4
        %v605 = vpop.permute.xlu0 %604
        %606 = vrot.lane.b32.xlu0 %v305, 4
        %v607 = vpop.permute.xlu0 %606
        %608 = vrot.lane.b32.xlu0 %v306, 4
        %v609 = vpop.permute.xlu0 %608
        %610 = vrot.lane.b32.xlu0 %v307, 4
        %v611 = vpop.permute.xlu0 %610
        %612 = vrot.lane.b32.xlu0 %v308, 4
        %v613 = vpop.permute.xlu0 %612
        %614 = vrot.lane.b32.xlu0 %v309, 4
        %v615 = vpop.permute.xlu0 %614
        %616 = vrot.lane.b32.xlu0 %v310, 4
        %v617 = vpop.permute.xlu0 %616
        %618 = vrot.lane.b32.xlu0 %v311, 4
        %v619 = vpop.permute.xlu0 %618
        %620 = vrot.lane.b32.xlu0 %v312, 4
        %v621 = vpop.permute.xlu0 %620
        %622 = vrot.lane.b32.xlu0 %v313, 4
        %v623 = vpop.permute.xlu0 %622
        %624 = vrot.lane.b32.xlu0 %v314, 4
        %v625 = vpop.permute.xlu0 %624
        %626 = vrot.lane.b32.xlu0 %v315, 4
        %v627 = vpop.permute.xlu0 %626
        %628 = vrot.lane.b32.xlu0 %v316, 4
        %v629 = vpop.permute.xlu0 %628
        %630 = vrot.lane.b32.xlu0 %v317, 4
        %v631 = vpop.permute.xlu0 %630
        %632 = vrot.lane.b32.xlu0 %v318, 4
        %v633 = vpop.permute.xlu0 %632
        %634 = vrot.lane.b32.xlu0 %v319, 4
        %v635 = vpop.permute.xlu0 %634
        %636 = vrot.lane.b32.xlu0 %v320, 4
        %v637 = vpop.permute.xlu0 %636
        %638 = vrot.lane.b32.xlu0 %v321, 4
        %v639 = vpop.permute.xlu0 %638
        %640 = vrot.lane.b32.xlu0 %v322, 4
        %v641 = vpop.permute.xlu0 %640
        %642 = vrot.lane.b32.xlu0 %v323, 4
        %v643 = vpop.permute.xlu0 %642
        %644 = vrot.lane.b32.xlu0 %v324, 4
        %v645 = vpop.permute.xlu0 %644
        %646 = vrot.lane.b32.xlu0 %v325, 4
        %v647 = vpop.permute.xlu0 %646
        %712 = vrot.lane.b32.xlu0 %v326, 8
        %v713 = vpop.permute.xlu0 %712
        %714 = vrot.lane.b32.xlu0 %v327, 8
        %v715 = vpop.permute.xlu0 %714
        %716 = vrot.lane.b32.xlu0 %v328, 8
        %v717 = vpop.permute.xlu0 %716
        %718 = vrot.lane.b32.xlu0 %v329, 8
        %v719 = vpop.permute.xlu0 %718
        %720 = vrot.lane.b32.xlu0 %v330, 8
        %v721 = vpop.permute.xlu0 %720
        %722 = vrot.lane.b32.xlu0 %v331, 8
        %v723 = vpop.permute.xlu0 %722
        %724 = vrot.lane.b32.xlu0 %v332, 8
        %v725 = vpop.permute.xlu0 %724
        %726 = vrot.lane.b32.xlu0 %v333, 8
        %v727 = vpop.permute.xlu0 %726
        %728 = vrot.lane.b32.xlu0 %v334, 8
        %v729 = vpop.permute.xlu0 %728
        %730 = vrot.lane.b32.xlu0 %v335, 8
        %v731 = vpop.permute.xlu0 %730
        %732 = vrot.lane.b32.xlu0 %v336, 8
        %v733 = vpop.permute.xlu0 %732
        %734 = vrot.lane.b32.xlu0 %v337, 8
        %v735 = vpop.permute.xlu0 %734
        %736 = vrot.lane.b32.xlu0 %v338, 8
        %v737 = vpop.permute.xlu0 %736
        %738 = vrot.lane.b32.xlu0 %v339, 8
        %v739 = vpop.permute.xlu0 %738
        %740 = vrot.lane.b32.xlu0 %v340, 8
        %v741 = vpop.permute.xlu0 %740
        %742 = vrot.lane.b32.xlu0 %v341, 8
        %v743 = vpop.permute.xlu0 %742
        %744 = vrot.lane.b32.xlu0 %v342, 8
        %v745 = vpop.permute.xlu0 %744
        %746 = vrot.lane.b32.xlu0 %v343, 8
        %v747 = vpop.permute.xlu0 %746
        %748 = vrot.lane.b32.xlu0 %v344, 8
        %v749 = vpop.permute.xlu0 %748
        %750 = vrot.lane.b32.xlu0 %v345, 8
        %v751 = vpop.permute.xlu0 %750
        %752 = vrot.lane.b32.xlu0 %v346, 8
        %v753 = vpop.permute.xlu0 %752
        %754 = vrot.lane.b32.xlu0 %v347, 8
        %v755 = vpop.permute.xlu0 %754
        %756 = vrot.lane.b32.xlu0 %v348, 8
        %v757 = vpop.permute.xlu0 %756
        %758 = vrot.lane.b32.xlu0 %v349, 8
        %v759 = vpop.permute.xlu0 %758
        %760 = vrot.lane.b32.xlu0 %v350, 8
        %v761 = vpop.permute.xlu0 %760
        %762 = vrot.lane.b32.xlu0 %v351, 8
        %v763 = vpop.permute.xlu0 %762
        %764 = vrot.lane.b32.xlu0 %v352, 8
        %v765 = vpop.permute.xlu0 %764
        %766 = vrot.lane.b32.xlu0 %v353, 8
        %v767 = vpop.permute.xlu0 %766
        %768 = vrot.lane.b32.xlu0 %v354, 8
        %v769 = vpop.permute.xlu0 %768
        %770 = vrot.lane.b32.xlu0 %v355, 8
        %v771 = vpop.permute.xlu0 %770
        %772 = vrot.lane.b32.xlu0 %v356, 8
        %v773 = vpop.permute.xlu0 %772
        %774 = vrot.lane.b32.xlu0 %v357, 8
        %v775 = vpop.permute.xlu0 %774
        %840 = vrot.lane.b32.xlu0 %v359, 12
        %v841 = vpop.permute.xlu0 %840
        %842 = vrot.lane.b32.xlu0 %v360, 12
        %v843 = vpop.permute.xlu0 %842
        %844 = vrot.lane.b32.xlu0 %v361, 12
        %v845 = vpop.permute.xlu0 %844
        %846 = vrot.lane.b32.xlu0 %v362, 12
        %v847 = vpop.permute.xlu0 %846
        %848 = vrot.lane.b32.xlu0 %v363, 12
        %v849 = vpop.permute.xlu0 %848
        %850 = vrot.lane.b32.xlu0 %v364, 12
        %v851 = vpop.permute.xlu0 %850
        %852 = vrot.lane.b32.xlu0 %v365, 12
        %v853 = vpop.permute.xlu0 %852
        %854 = vrot.lane.b32.xlu0 %v366, 12
        %v855 = vpop.permute.xlu0 %854
        %856 = vrot.lane.b32.xlu0 %v367, 12
        %v857 = vpop.permute.xlu0 %856
        %858 = vrot.lane.b32.xlu0 %v368, 12
        %v859 = vpop.permute.xlu0 %858
        %860 = vrot.lane.b32.xlu0 %v369, 12
        %v861 = vpop.permute.xlu0 %860
        %862 = vrot.lane.b32.xlu0 %v370, 12
        %v863 = vpop.permute.xlu0 %862
        %864 = vrot.lane.b32.xlu0 %v371, 12
        %v865 = vpop.permute.xlu0 %864
        %866 = vrot.lane.b32.xlu0 %v372, 12
        %v867 = vpop.permute.xlu0 %866
        %868 = vrot.lane.b32.xlu0 %v373, 12
        %v869 = vpop.permute.xlu0 %868
        %870 = vrot.lane.b32.xlu0 %v374, 12
        %v871 = vpop.permute.xlu0 %870
        %872 = vrot.lane.b32.xlu0 %v375, 12
        %v873 = vpop.permute.xlu0 %872
        %874 = vrot.lane.b32.xlu0 %v376, 12
        %v875 = vpop.permute.xlu0 %874
        %876 = vrot.lane.b32.xlu0 %v377, 12
        %v877 = vpop.permute.xlu0 %876
        %878 = vrot.lane.b32.xlu0 %v378, 12
        %v879 = vpop.permute.xlu0 %878
        %880 = vrot.lane.b32.xlu0 %v379, 12
        %v881 = vpop.permute.xlu0 %880
        %882 = vrot.lane.b32.xlu0 %v380, 12
        %v883 = vpop.permute.xlu0 %882
        %884 = vrot.lane.b32.xlu0 %v381, 12
        %v885 = vpop.permute.xlu0 %884
        %886 = vrot.lane.b32.xlu0 %v382, 12
        %v887 = vpop.permute.xlu0 %886
        %888 = vrot.lane.b32.xlu0 %v383, 12
        %v889 = vpop.permute.xlu0 %888
        %890 = vrot.lane.b32.xlu0 %v384, 12
        %v891 = vpop.permute.xlu0 %890
        %892 = vrot.lane.b32.xlu0 %v385, 12
        %v893 = vpop.permute.xlu0 %892
        %894 = vrot.lane.b32.xlu0 %v386, 12
        %v895 = vpop.permute.xlu0 %894
        %896 = vrot.lane.b32.xlu0 %v387, 12
        %v897 = vpop.permute.xlu0 %896
        %898 = vrot.lane.b32.xlu0 %v388, 12
        %v899 = vpop.permute.xlu0 %898
        %900 = vrot.lane.b32.xlu0 %v389, 12
        %v901 = vpop.permute.xlu0 %900
        %902 = vrot.lane.b32.xlu0 %v390, 12
        %v903 = vpop.permute.xlu0 %902
        %968 = vrot.lane.b32.xlu0 %v391, 16
        %v969 = vpop.permute.xlu0 %968
        %970 = vrot.lane.b32.xlu0 %v392, 16
        %v971 = vpop.permute.xlu0 %970
        %972 = vrot.lane.b32.xlu0 %v393, 16
        %v973 = vpop.permute.xlu0 %972
        %974 = vrot.lane.b32.xlu0 %v394, 16
        %v975 = vpop.permute.xlu0 %974
        %976 = vrot.lane.b32.xlu0 %v395, 16
        %v977 = vpop.permute.xlu0 %976
        %978 = vrot.lane.b32.xlu0 %v396, 16
        %v979 = vpop.permute.xlu0 %978
        %980 = vrot.lane.b32.xlu0 %v397, 16
        %v981 = vpop.permute.xlu0 %980
        %982 = vrot.lane.b32.xlu0 %v398, 16
        %v983 = vpop.permute.xlu0 %982
        %984 = vrot.lane.b32.xlu0 %v399, 16
        %v985 = vpop.permute.xlu0 %984
        %986 = vrot.lane.b32.xlu0 %v400, 16
        %v987 = vpop.permute.xlu0 %986
        %988 = vrot.lane.b32.xlu0 %v401, 16
        %v989 = vpop.permute.xlu0 %988
        %990 = vrot.lane.b32.xlu0 %v402, 16
        %v991 = vpop.permute.xlu0 %990
        %992 = vrot.lane.b32.xlu0 %v403, 16
        %v993 = vpop.permute.xlu0 %992
        %994 = vrot.lane.b32.xlu0 %v404, 16
        %v995 = vpop.permute.xlu0 %994
        %996 = vrot.lane.b32.xlu0 %v405, 16
        %v997 = vpop.permute.xlu0 %996
        %998 = vrot.lane.b32.xlu0 %v406, 16
        %v999 = vpop.permute.xlu0 %998
        %1000 = vrot.lane.b32.xlu0 %v407, 16
        %v1001 = vpop.permute.xlu0 %1000
        %1002 = vrot.lane.b32.xlu0 %v408, 16
        %v1003 = vpop.permute.xlu0 %1002
        %1004 = vrot.lane.b32.xlu0 %v409, 16
        %v1005 = vpop.permute.xlu0 %1004
        %1006 = vrot.lane.b32.xlu0 %v410, 16
        %v1007 = vpop.permute.xlu0 %1006
        %1008 = vrot.lane.b32.xlu0 %v411, 16
        %v1009 = vpop.permute.xlu0 %1008
        %1010 = vrot.lane.b32.xlu0 %v412, 16
        %v1011 = vpop.permute.xlu0 %1010
        %1012 = vrot.lane.b32.xlu0 %v413, 16
        %v1013 = vpop.permute.xlu0 %1012
        %1014 = vrot.lane.b32.xlu0 %v414, 16
        %v1015 = vpop.permute.xlu0 %1014
        %1016 = vrot.lane.b32.xlu0 %v415, 16
        %v1017 = vpop.permute.xlu0 %1016
        %1018 = vrot.lane.b32.xlu0 %v416, 16
        %v1019 = vpop.permute.xlu0 %1018
        %1020 = vrot.lane.b32.xlu0 %v417, 16
        %v1021 = vpop.permute.xlu0 %1020
        %1022 = vrot.lane.b32.xlu0 %v418, 16
        %v1023 = vpop.permute.xlu0 %1022
        %1024 = vrot.lane.b32.xlu0 %v419, 16
        %v1025 = vpop.permute.xlu0 %1024
        %1026 = vrot.lane.b32.xlu0 %v420, 16
        %v1027 = vpop.permute.xlu0 %1026
        %1028 = vrot.lane.b32.xlu0 %v421, 16
        %v1029 = vpop.permute.xlu0 %1028
        %1030 = vrot.lane.b32.xlu0 %v422, 16
        %v1031 = vpop.permute.xlu0 %1030
        %1096 = vrot.lane.b32.xlu0 %v423, 20
        %v1097 = vpop.permute.xlu0 %1096
        %1098 = vrot.lane.b32.xlu0 %v424, 20
        %v1099 = vpop.permute.xlu0 %1098
        %1100 = vrot.lane.b32.xlu0 %v425, 20
        %v1101 = vpop.permute.xlu0 %1100
        %1102 = vrot.lane.b32.xlu0 %v426, 20
        %v1103 = vpop.permute.xlu0 %1102
        %1104 = vrot.lane.b32.xlu0 %v427, 20
        %v1105 = vpop.permute.xlu0 %1104
        %1106 = vrot.lane.b32.xlu0 %v428, 20
        %v1107 = vpop.permute.xlu0 %1106
        %1108 = vrot.lane.b32.xlu0 %v429, 20
        %v1109 = vpop.permute.xlu0 %1108
        %1110 = vrot.lane.b32.xlu0 %v430, 20
        %v1111 = vpop.permute.xlu0 %1110
        %1112 = vrot.lane.b32.xlu0 %v431, 20
        %v1113 = vpop.permute.xlu0 %1112
        %1114 = vrot.lane.b32.xlu0 %v432, 20
        %v1115 = vpop.permute.xlu0 %1114
        %1116 = vrot.lane.b32.xlu0 %v433, 20
        %v1117 = vpop.permute.xlu0 %1116
        %1118 = vrot.lane.b32.xlu0 %v434, 20
        %v1119 = vpop.permute.xlu0 %1118
        %1120 = vrot.lane.b32.xlu0 %v435, 20
        %v1121 = vpop.permute.xlu0 %1120
        %1122 = vrot.lane.b32.xlu0 %v436, 20
        %v1123 = vpop.permute.xlu0 %1122
        %1124 = vrot.lane.b32.xlu0 %v437, 20
        %v1125 = vpop.permute.xlu0 %1124
        %1126 = vrot.lane.b32.xlu0 %v438, 20
        %v1127 = vpop.permute.xlu0 %1126
        %1128 = vrot.lane.b32.xlu0 %v439, 20
        %v1129 = vpop.permute.xlu0 %1128
        %1130 = vrot.lane.b32.xlu0 %v440, 20
        %v1131 = vpop.permute.xlu0 %1130
        %1132 = vrot.lane.b32.xlu0 %v441, 20
        %v1133 = vpop.permute.xlu0 %1132
        %1134 = vrot.lane.b32.xlu0 %v442, 20
        %v1135 = vpop.permute.xlu0 %1134
        %1136 = vrot.lane.b32.xlu0 %v443, 20
        %v1137 = vpop.permute.xlu0 %1136
        %1138 = vrot.lane.b32.xlu0 %v444, 20
        %v1139 = vpop.permute.xlu0 %1138
        %1140 = vrot.lane.b32.xlu0 %v445, 20
        %v1141 = vpop.permute.xlu0 %1140
        %1142 = vrot.lane.b32.xlu0 %v446, 20
        %v1143 = vpop.permute.xlu0 %1142
        %1144 = vrot.lane.b32.xlu0 %v447, 20
        %v1145 = vpop.permute.xlu0 %1144
        %1146 = vrot.lane.b32.xlu0 %v448, 20
        %v1147 = vpop.permute.xlu0 %1146
        %1148 = vrot.lane.b32.xlu0 %v449, 20
        %v1149 = vpop.permute.xlu0 %1148
        %1150 = vrot.lane.b32.xlu0 %v450, 20
        %v1151 = vpop.permute.xlu0 %1150
        %1152 = vrot.lane.b32.xlu0 %v451, 20
        %v1153 = vpop.permute.xlu0 %1152
        %1154 = vrot.lane.b32.xlu0 %v452, 20
        %v1155 = vpop.permute.xlu0 %1154
        %1156 = vrot.lane.b32.xlu0 %v453, 20
        %v1157 = vpop.permute.xlu0 %1156
        %1158 = vrot.lane.b32.xlu0 %v454, 20
        %v1159 = vpop.permute.xlu0 %1158
        %1224 = vrot.lane.b32.xlu0 %v456, 24
        %v1225 = vpop.permute.xlu0 %1224
        %1226 = vrot.lane.b32.xlu0 %v457, 24
        %v1227 = vpop.permute.xlu0 %1226
        %1228 = vrot.lane.b32.xlu0 %v458, 24
        %v1229 = vpop.permute.xlu0 %1228
        %1230 = vrot.lane.b32.xlu0 %v459, 24
        %v1231 = vpop.permute.xlu0 %1230
        %1232 = vrot.lane.b32.xlu0 %v460, 24
        %v1233 = vpop.permute.xlu0 %1232
        %1234 = vrot.lane.b32.xlu0 %v461, 24
        %v1235 = vpop.permute.xlu0 %1234
        %1236 = vrot.lane.b32.xlu0 %v462, 24
        %v1237 = vpop.permute.xlu0 %1236
        %1238 = vrot.lane.b32.xlu0 %v463, 24
        %v1239 = vpop.permute.xlu0 %1238
        %1240 = vrot.lane.b32.xlu0 %v464, 24
        %v1241 = vpop.permute.xlu0 %1240
        %1242 = vrot.lane.b32.xlu0 %v465, 24
        %v1243 = vpop.permute.xlu0 %1242
        %1244 = vrot.lane.b32.xlu0 %v466, 24
        %v1245 = vpop.permute.xlu0 %1244
        %1246 = vrot.lane.b32.xlu0 %v467, 24
        %v1247 = vpop.permute.xlu0 %1246
        %1248 = vrot.lane.b32.xlu0 %v468, 24
        %v1249 = vpop.permute.xlu0 %1248
        %1250 = vrot.lane.b32.xlu0 %v469, 24
        %v1251 = vpop.permute.xlu0 %1250
        %1252 = vrot.lane.b32.xlu0 %v470, 24
        %v1253 = vpop.permute.xlu0 %1252
        %1254 = vrot.lane.b32.xlu0 %v471, 24
        %v1255 = vpop.permute.xlu0 %1254
        %1256 = vrot.lane.b32.xlu0 %v472, 24
        %v1257 = vpop.permute.xlu0 %1256
        %1258 = vrot.lane.b32.xlu0 %v473, 24
        %v1259 = vpop.permute.xlu0 %1258
        %1260 = vrot.lane.b32.xlu0 %v474, 24
        %v1261 = vpop.permute.xlu0 %1260
        %1262 = vrot.lane.b32.xlu0 %v475, 24
        %v1263 = vpop.permute.xlu0 %1262
        %1264 = vrot.lane.b32.xlu0 %v476, 24
        %v1265 = vpop.permute.xlu0 %1264
        %1266 = vrot.lane.b32.xlu0 %v477, 24
        %v1267 = vpop.permute.xlu0 %1266
        %1268 = vrot.lane.b32.xlu0 %v478, 24
        %v1269 = vpop.permute.xlu0 %1268
        %1270 = vrot.lane.b32.xlu0 %v479, 24
        %v1271 = vpop.permute.xlu0 %1270
        %1272 = vrot.lane.b32.xlu0 %v480, 24
        %v1273 = vpop.permute.xlu0 %1272
        %1274 = vrot.lane.b32.xlu0 %v481, 24
        %v1275 = vpop.permute.xlu0 %1274
        %1276 = vrot.lane.b32.xlu0 %v482, 24
        %v1277 = vpop.permute.xlu0 %1276
        %1278 = vrot.lane.b32.xlu0 %v483, 24
        %v1279 = vpop.permute.xlu0 %1278
        %1280 = vrot.lane.b32.xlu0 %v484, 24
        %v1281 = vpop.permute.xlu0 %1280
        %1282 = vrot.lane.b32.xlu0 %v485, 24
        %v1283 = vpop.permute.xlu0 %1282
        %1284 = vrot.lane.b32.xlu0 %v486, 24
        %v1285 = vpop.permute.xlu0 %1284
        %1286 = vrot.lane.b32.xlu0 %v487, 24
        %v1287 = vpop.permute.xlu0 %1286
        %1352 = vrot.lane.b32.xlu0 %v488, 28
        %v1353 = vpop.permute.xlu0 %1352
        %1354 = vrot.lane.b32.xlu0 %v489, 28
        %v1355 = vpop.permute.xlu0 %1354
        %1356 = vrot.lane.b32.xlu0 %v490, 28
        %v1357 = vpop.permute.xlu0 %1356
        %1358 = vrot.lane.b32.xlu0 %v491, 28
        %v1359 = vpop.permute.xlu0 %1358
        %1360 = vrot.lane.b32.xlu0 %v492, 28
        %v1361 = vpop.permute.xlu0 %1360
        %1362 = vrot.lane.b32.xlu0 %v493, 28
        %v1363 = vpop.permute.xlu0 %1362
        %1364 = vrot.lane.b32.xlu0 %v494, 28
        %v1365 = vpop.permute.xlu0 %1364
        %1366 = vrot.lane.b32.xlu0 %v495, 28
        %v1367 = vpop.permute.xlu0 %1366
        %1368 = vrot.lane.b32.xlu0 %v496, 28
        %v1369 = vpop.permute.xlu0 %1368
        %1370 = vrot.lane.b32.xlu0 %v497, 28
        %v1371 = vpop.permute.xlu0 %1370
        %1372 = vrot.lane.b32.xlu0 %v498, 28
        %v1373 = vpop.permute.xlu0 %1372
        %1374 = vrot.lane.b32.xlu0 %v499, 28
        %v1375 = vpop.permute.xlu0 %1374
        %1376 = vrot.lane.b32.xlu0 %v500, 28
        %v1377 = vpop.permute.xlu0 %1376
        %1378 = vrot.lane.b32.xlu0 %v501, 28
        %v1379 = vpop.permute.xlu0 %1378
        %1380 = vrot.lane.b32.xlu0 %v502, 28
        %v1381 = vpop.permute.xlu0 %1380
        %1382 = vrot.lane.b32.xlu0 %v503, 28
        %v1383 = vpop.permute.xlu0 %1382
        %1384 = vrot.lane.b32.xlu0 %v504, 28
        %v1385 = vpop.permute.xlu0 %1384
        %1386 = vrot.lane.b32.xlu0 %v505, 28
        %v1387 = vpop.permute.xlu0 %1386
        %1388 = vrot.lane.b32.xlu0 %v506, 28
        %v1389 = vpop.permute.xlu0 %1388
        %1390 = vrot.lane.b32.xlu0 %v507, 28
        %v1391 = vpop.permute.xlu0 %1390
        %1392 = vrot.lane.b32.xlu0 %v508, 28
        %v1393 = vpop.permute.xlu0 %1392
        %1394 = vrot.lane.b32.xlu0 %v509, 28
        %v1395 = vpop.permute.xlu0 %1394
        %1396 = vrot.lane.b32.xlu0 %v510, 28
        %v1397 = vpop.permute.xlu0 %1396
        %1398 = vrot.lane.b32.xlu0 %v511, 28
        %v1399 = vpop.permute.xlu0 %1398
        %1400 = vrot.lane.b32.xlu0 %v512, 28
        %v1401 = vpop.permute.xlu0 %1400
        %1402 = vrot.lane.b32.xlu0 %v513, 28
        %v1403 = vpop.permute.xlu0 %1402
        %1404 = vrot.lane.b32.xlu0 %v514, 28
        %v1405 = vpop.permute.xlu0 %1404
        %1406 = vrot.lane.b32.xlu0 %v515, 28
        %v1407 = vpop.permute.xlu0 %1406
        %1408 = vrot.lane.b32.xlu0 %v516, 28
        %v1409 = vpop.permute.xlu0 %1408
        %1410 = vrot.lane.b32.xlu0 %v517, 28
        %v1411 = vpop.permute.xlu0 %1410
        %1412 = vrot.lane.b32.xlu0 %v518, 28
        %v1413 = vpop.permute.xlu0 %1412
        %1414 = vrot.lane.b32.xlu0 %v519, 28
        %v1415 = vpop.permute.xlu0 %1414
        %1480 = vrot.lane.b32.xlu0 %v520, 32
        %v1481 = vpop.permute.xlu0 %1480
        %1482 = vrot.lane.b32.xlu0 %v521, 32
        %v1483 = vpop.permute.xlu0 %1482
        %1484 = vrot.lane.b32.xlu0 %v522, 32
        %v1485 = vpop.permute.xlu0 %1484
        %1486 = vrot.lane.b32.xlu0 %v523, 32
        %v1487 = vpop.permute.xlu0 %1486
        %1488 = vrot.lane.b32.xlu0 %v524, 32
        %v1489 = vpop.permute.xlu0 %1488
        %1490 = vrot.lane.b32.xlu0 %v525, 32
        %v1491 = vpop.permute.xlu0 %1490
        %1492 = vrot.lane.b32.xlu0 %v526, 32
        %v1493 = vpop.permute.xlu0 %1492
        %1494 = vrot.lane.b32.xlu0 %v527, 32
        %v1495 = vpop.permute.xlu0 %1494
        %1496 = vrot.lane.b32.xlu0 %v528, 32
        %v1497 = vpop.permute.xlu0 %1496
        %1498 = vrot.lane.b32.xlu0 %v529, 32
        %v1499 = vpop.permute.xlu0 %1498
        %1500 = vrot.lane.b32.xlu0 %v530, 32
        %v1501 = vpop.permute.xlu0 %1500
        %1502 = vrot.lane.b32.xlu0 %v531, 32
        %v1503 = vpop.permute.xlu0 %1502
        %1504 = vrot.lane.b32.xlu0 %v532, 32
        %v1505 = vpop.permute.xlu0 %1504
        %1506 = vrot.lane.b32.xlu0 %v533, 32
        %v1507 = vpop.permute.xlu0 %1506
        %1508 = vrot.lane.b32.xlu0 %v534, 32
        %v1509 = vpop.permute.xlu0 %1508
        %1510 = vrot.lane.b32.xlu0 %v535, 32
        %v1511 = vpop.permute.xlu0 %1510
        %1512 = vrot.lane.b32.xlu0 %v536, 32
        %v1513 = vpop.permute.xlu0 %1512
        %1514 = vrot.lane.b32.xlu0 %v537, 32
        %v1515 = vpop.permute.xlu0 %1514
        %1516 = vrot.lane.b32.xlu0 %v538, 32
        %v1517 = vpop.permute.xlu0 %1516
        %1518 = vrot.lane.b32.xlu0 %v539, 32
        %v1519 = vpop.permute.xlu0 %1518
        %1520 = vrot.lane.b32.xlu0 %v540, 32
        %v1521 = vpop.permute.xlu0 %1520
        %1522 = vrot.lane.b32.xlu0 %v541, 32
        %v1523 = vpop.permute.xlu0 %1522
        %1524 = vrot.lane.b32.xlu0 %v542, 32
        %v1525 = vpop.permute.xlu0 %1524
        %1526 = vrot.lane.b32.xlu0 %v543, 32
        %v1527 = vpop.permute.xlu0 %1526
        %1528 = vrot.lane.b32.xlu0 %v544, 32
        %v1529 = vpop.permute.xlu0 %1528
        %1530 = vrot.lane.b32.xlu0 %v545, 32
        %v1531 = vpop.permute.xlu0 %1530
        %1532 = vrot.lane.b32.xlu0 %v546, 32
        %v1533 = vpop.permute.xlu0 %1532
        %1534 = vrot.lane.b32.xlu0 %v547, 32
        %v1535 = vpop.permute.xlu0 %1534
        %1536 = vrot.lane.b32.xlu0 %v548, 32
        %v1537 = vpop.permute.xlu0 %1536
        %1538 = vrot.lane.b32.xlu0 %v549, 32
        %v1539 = vpop.permute.xlu0 %1538
        %1540 = vrot.lane.b32.xlu0 %v550, 32
        %v1541 = vpop.permute.xlu0 %1540
        %1542 = vrot.lane.b32.xlu0 %v551, 32
        %v1543 = vpop.permute.xlu0 %1542
        %vm1576 = vcmask 31744
        %v1577 = vsel %vm1576, %v262, %v585
        %v1578 = vsel %vm1576, %v263, %v587
        %v1579 = vsel %vm1576, %v264, %v589
        %v1580 = vsel %vm1576, %v265, %v591
        %v1581 = vsel %vm1576, %v266, %v593
        %v1582 = vsel %vm1576, %v267, %v595
        %v1583 = vsel %vm1576, %v268, %v597
        %v1584 = vsel %vm1576, %v269, %v599
        %v1585 = vsel %vm1576, %v270, %v601
        %v1586 = vsel %vm1576, %v271, %v603
        %v1587 = vsel %vm1576, %v272, %v605
        %v1588 = vsel %vm1576, %v273, %v607
        %v1589 = vsel %vm1576, %v274, %v609
        %v1590 = vsel %vm1576, %v275, %v611
        %v1591 = vsel %vm1576, %v276, %v613
        %v1592 = vsel %vm1576, %v277, %v615
        %v1593 = vsel %vm1576, %v278, %v617
        %v1594 = vsel %vm1576, %v279, %v619
        %v1595 = vsel %vm1576, %v280, %v621
        %v1596 = vsel %vm1576, %v281, %v623
        %v1597 = vsel %vm1576, %v282, %v625
        %v1598 = vsel %vm1576, %v283, %v627
        %v1599 = vsel %vm1576, %v284, %v629
        %v1600 = vsel %vm1576, %v285, %v631
        %v1601 = vsel %vm1576, %v286, %v633
        %v1602 = vsel %vm1576, %v287, %v635
        %v1603 = vsel %vm1576, %v288, %v637
        %v1604 = vsel %vm1576, %v289, %v639
        %v1605 = vsel %vm1576, %v290, %v641
        %v1606 = vsel %vm1576, %v291, %v643
        %v1607 = vsel %vm1576, %v292, %v645
        %v1608 = vsel %vm1576, %v293, %v647
        %vm1609 = vcmask 64512
        %v1610 = vsel %vm1609, %v1577, %v713
        %v1611 = vsel %vm1609, %v1578, %v715
        %v1612 = vsel %vm1609, %v1579, %v717
        %v1613 = vsel %vm1609, %v1580, %v719
        %v1614 = vsel %vm1609, %v1581, %v721
        %v1615 = vsel %vm1609, %v1582, %v723
        %v1616 = vsel %vm1609, %v1583, %v725
        %v1617 = vsel %vm1609, %v1584, %v727
        %v1618 = vsel %vm1609, %v1585, %v729
        %v1619 = vsel %vm1609, %v1586, %v731
        %v1620 = vsel %vm1609, %v1587, %v733
        %v1621 = vsel %vm1609, %v1588, %v735
        %v1622 = vsel %vm1609, %v1589, %v737
        %v1623 = vsel %vm1609, %v1590, %v739
        %v1624 = vsel %vm1609, %v1591, %v741
        %v1625 = vsel %vm1609, %v1592, %v743
        %v1626 = vsel %vm1609, %v1593, %v745
        %v1627 = vsel %vm1609, %v1594, %v747
        %v1628 = vsel %vm1609, %v1595, %v749
        %v1629 = vsel %vm1609, %v1596, %v751
        %v1630 = vsel %vm1609, %v1597, %v753
        %v1631 = vsel %vm1609, %v1598, %v755
        %v1632 = vsel %vm1609, %v1599, %v757
        %v1633 = vsel %vm1609, %v1600, %v759
        %v1634 = vsel %vm1609, %v1601, %v761
        %v1635 = vsel %vm1609, %v1602, %v763
        %v1636 = vsel %vm1609, %v1603, %v765
        %v1637 = vsel %vm1609, %v1604, %v767
        %v1638 = vsel %vm1609, %v1605, %v769
        %v1639 = vsel %vm1609, %v1606, %v771
        %v1640 = vsel %vm1609, %v1607, %v773
        %v1641 = vsel %vm1609, %v1608, %v775
        %vm1642 = vcmask 97280
        %v1643 = vsel %vm1642, %v1610, %v841
        %v1644 = vsel %vm1642, %v1611, %v843
        %v1645 = vsel %vm1642, %v1612, %v845
        %v1646 = vsel %vm1642, %v1613, %v847
        %v1647 = vsel %vm1642, %v1614, %v849
        %v1648 = vsel %vm1642, %v1615, %v851
        %v1649 = vsel %vm1642, %v1616, %v853
        %v1650 = vsel %vm1642, %v1617, %v855
        %v1651 = vsel %vm1642, %v1618, %v857
        %v1652 = vsel %vm1642, %v1619, %v859
        %v1653 = vsel %vm1642, %v1620, %v861
        %v1654 = vsel %vm1642, %v1621, %v863
        %v1655 = vsel %vm1642, %v1622, %v865
        %v1656 = vsel %vm1642, %v1623, %v867
        %v1657 = vsel %vm1642, %v1624, %v869
        %v1658 = vsel %vm1642, %v1625, %v871
        %v1659 = vsel %vm1642, %v1626, %v873
        %v1660 = vsel %vm1642, %v1627, %v875
        %v1661 = vsel %vm1642, %v1628, %v877
        %v1662 = vsel %vm1642, %v1629, %v879
        %v1663 = vsel %vm1642, %v1630, %v881
        %v1664 = vsel %vm1642, %v1631, %v883
        %v1665 = vsel %vm1642, %v1632, %v885
        %v1666 = vsel %vm1642, %v1633, %v887
        %v1667 = vsel %vm1642, %v1634, %v889
        %v1668 = vsel %vm1642, %v1635, %v891
        %v1669 = vsel %vm1642, %v1636, %v893
        %v1670 = vsel %vm1642, %v1637, %v895
        %v1671 = vsel %vm1642, %v1638, %v897
        %v1672 = vsel %vm1642, %v1639, %v899
        %v1673 = vsel %vm1642, %v1640, %v901
        %v1674 = vsel %vm1642, %v1641, %v903
        %vm1675 = vcmask 130048
        %v1676 = vsel %vm1675, %v1643, %v969
        %v1677 = vsel %vm1675, %v1644, %v971
        %v1678 = vsel %vm1675, %v1645, %v973
        %v1679 = vsel %vm1675, %v1646, %v975
        %v1680 = vsel %vm1675, %v1647, %v977
        %v1681 = vsel %vm1675, %v1648, %v979
        %v1682 = vsel %vm1675, %v1649, %v981
        %v1683 = vsel %vm1675, %v1650, %v983
        %v1684 = vsel %vm1675, %v1651, %v985
        %v1685 = vsel %vm1675, %v1652, %v987
        %v1686 = vsel %vm1675, %v1653, %v989
        %v1687 = vsel %vm1675, %v1654, %v991
        %v1688 = vsel %vm1675, %v1655, %v993
        %v1689 = vsel %vm1675, %v1656, %v995
        %v1690 = vsel %vm1675, %v1657, %v997
        %v1691 = vsel %vm1675, %v1658, %v999
        %v1692 = vsel %vm1675, %v1659, %v1001
        %v1693 = vsel %vm1675, %v1660, %v1003
        %v1694 = vsel %vm1675, %v1661, %v1005
        %v1695 = vsel %vm1675, %v1662, %v1007
        %v1696 = vsel %vm1675, %v1663, %v1009
        %v1697 = vsel %vm1675, %v1664, %v1011
        %v1698 = vsel %vm1675, %v1665, %v1013
        %v1699 = vsel %vm1675, %v1666, %v1015
        %v1700 = vsel %vm1675, %v1667, %v1017
        %v1701 = vsel %vm1675, %v1668, %v1019
        %v1702 = vsel %vm1675, %v1669, %v1021
        %v1703 = vsel %vm1675, %v1670, %v1023
        %v1704 = vsel %vm1675, %v1671, %v1025
        %v1705 = vsel %vm1675, %v1672, %v1027
        %v1706 = vsel %vm1675, %v1673, %v1029
        %v1707 = vsel %vm1675, %v1674, %v1031
        %vm1708 = vcmask 162816
        %v1709 = vsel %vm1708, %v1676, %v1097
        %v1710 = vsel %vm1708, %v1677, %v1099
        %v1711 = vsel %vm1708, %v1678, %v1101
        %v1712 = vsel %vm1708, %v1679, %v1103
        %v1713 = vsel %vm1708, %v1680, %v1105
        %v1714 = vsel %vm1708, %v1681, %v1107
        %v1715 = vsel %vm1708, %v1682, %v1109
        %v1716 = vsel %vm1708, %v1683, %v1111
        %v1717 = vsel %vm1708, %v1684, %v1113
        %v1718 = vsel %vm1708, %v1685, %v1115
        %v1719 = vsel %vm1708, %v1686, %v1117
        %v1720 = vsel %vm1708, %v1687, %v1119
        %v1721 = vsel %vm1708, %v1688, %v1121
        %v1722 = vsel %vm1708, %v1689, %v1123
        %v1723 = vsel %vm1708, %v1690, %v1125
        %v1724 = vsel %vm1708, %v1691, %v1127
        %v1725 = vsel %vm1708, %v1692, %v1129
        %v1726 = vsel %vm1708, %v1693, %v1131
        %v1727 = vsel %vm1708, %v1694, %v1133
        %v1728 = vsel %vm1708, %v1695, %v1135
        %v1729 = vsel %vm1708, %v1696, %v1137
        %v1730 = vsel %vm1708, %v1697, %v1139
        %v1731 = vsel %vm1708, %v1698, %v1141
        %v1732 = vsel %vm1708, %v1699, %v1143
        %v1733 = vsel %vm1708, %v1700, %v1145
        %v1734 = vsel %vm1708, %v1701, %v1147
        %v1735 = vsel %vm1708, %v1702, %v1149
        %v1736 = vsel %vm1708, %v1703, %v1151
        %v1737 = vsel %vm1708, %v1704, %v1153
        %v1738 = vsel %vm1708, %v1705, %v1155
        %v1739 = vsel %vm1708, %v1706, %v1157
        %v1740 = vsel %vm1708, %v1707, %v1159
        %vm1741 = vcmask 195584
        %v1742 = vsel %vm1741, %v1709, %v1225
        %v1743 = vsel %vm1741, %v1710, %v1227
        %v1744 = vsel %vm1741, %v1711, %v1229
        %v1745 = vsel %vm1741, %v1712, %v1231
        %v1746 = vsel %vm1741, %v1713, %v1233
        %v1747 = vsel %vm1741, %v1714, %v1235
        %v1748 = vsel %vm1741, %v1715, %v1237
        %v1749 = vsel %vm1741, %v1716, %v1239
        %v1750 = vsel %vm1741, %v1717, %v1241
        %v1751 = vsel %vm1741, %v1718, %v1243
        %v1752 = vsel %vm1741, %v1719, %v1245
        %v1753 = vsel %vm1741, %v1720, %v1247
        %v1754 = vsel %vm1741, %v1721, %v1249
        %v1755 = vsel %vm1741, %v1722, %v1251
        %v1756 = vsel %vm1741, %v1723, %v1253
        %v1757 = vsel %vm1741, %v1724, %v1255
        %v1758 = vsel %vm1741, %v1725, %v1257
        %v1759 = vsel %vm1741, %v1726, %v1259
        %v1760 = vsel %vm1741, %v1727, %v1261
        %v1761 = vsel %vm1741, %v1728, %v1263
        %v1762 = vsel %vm1741, %v1729, %v1265
        %v1763 = vsel %vm1741, %v1730, %v1267
        %v1764 = vsel %vm1741, %v1731, %v1269
        %v1765 = vsel %vm1741, %v1732, %v1271
        %v1766 = vsel %vm1741, %v1733, %v1273
        %v1767 = vsel %vm1741, %v1734, %v1275
        %v1768 = vsel %vm1741, %v1735, %v1277
        %v1769 = vsel %vm1741, %v1736, %v1279
        %v1770 = vsel %vm1741, %v1737, %v1281
        %v1771 = vsel %vm1741, %v1738, %v1283
        %v1772 = vsel %vm1741, %v1739, %v1285
        %v1773 = vsel %vm1741, %v1740, %v1287
        %vm1774 = vcmask 228352
        %v1775 = vsel %vm1774, %v1742, %v1353
        %v1776 = vsel %vm1774, %v1743, %v1355
        %v1777 = vsel %vm1774, %v1744, %v1357
        %v1778 = vsel %vm1774, %v1745, %v1359
        %v1779 = vsel %vm1774, %v1746, %v1361
        %v1780 = vsel %vm1774, %v1747, %v1363
        %v1781 = vsel %vm1774, %v1748, %v1365
        %v1782 = vsel %vm1774, %v1749, %v1367
        %v1783 = vsel %vm1774, %v1750, %v1369
        %v1784 = vsel %vm1774, %v1751, %v1371
        %v1785 = vsel %vm1774, %v1752, %v1373
        %v1786 = vsel %vm1774, %v1753, %v1375
        %v1787 = vsel %vm1774, %v1754, %v1377
        %v1788 = vsel %vm1774, %v1755, %v1379
        %v1789 = vsel %vm1774, %v1756, %v1381
        %v1790 = vsel %vm1774, %v1757, %v1383
        %v1791 = vsel %vm1774, %v1758, %v1385
        %v1792 = vsel %vm1774, %v1759, %v1387
        %v1793 = vsel %vm1774, %v1760, %v1389
        %v1794 = vsel %vm1774, %v1761, %v1391
        %v1795 = vsel %vm1774, %v1762, %v1393
        %v1796 = vsel %vm1774, %v1763, %v1395
        %v1797 = vsel %vm1774, %v1764, %v1397
        %v1798 = vsel %vm1774, %v1765, %v1399
        %v1799 = vsel %vm1774, %v1766, %v1401
        %v1800 = vsel %vm1774, %v1767, %v1403
        %v1801 = vsel %vm1774, %v1768, %v1405
        %v1802 = vsel %vm1774, %v1769, %v1407
        %v1803 = vsel %vm1774, %v1770, %v1409
        %v1804 = vsel %vm1774, %v1771, %v1411
        %v1805 = vsel %vm1774, %v1772, %v1413
        %v1806 = vsel %vm1774, %v1773, %v1415
        %vm1807 = vcmask 261120
        %v1808 = vsel %vm1807, %v1775, %v1481
        %v1809 = vsel %vm1807, %v1776, %v1483
        %v1810 = vsel %vm1807, %v1777, %v1485
        %v1811 = vsel %vm1807, %v1778, %v1487
        %v1812 = vsel %vm1807, %v1779, %v1489
        %v1813 = vsel %vm1807, %v1780, %v1491
        %v1814 = vsel %vm1807, %v1781, %v1493
        %v1815 = vsel %vm1807, %v1782, %v1495
        %v1816 = vsel %vm1807, %v1783, %v1497
        %v1817 = vsel %vm1807, %v1784, %v1499
        %v1818 = vsel %vm1807, %v1785, %v1501
        %v1819 = vsel %vm1807, %v1786, %v1503
        %v1820 = vsel %vm1807, %v1787, %v1505
        %v1821 = vsel %vm1807, %v1788, %v1507
        %v1822 = vsel %vm1807, %v1789, %v1509
        %v1823 = vsel %vm1807, %v1790, %v1511
        %v1824 = vsel %vm1807, %v1791, %v1513
        %v1825 = vsel %vm1807, %v1792, %v1515
        %v1826 = vsel %vm1807, %v1793, %v1517
        %v1827 = vsel %vm1807, %v1794, %v1519
        %v1828 = vsel %vm1807, %v1795, %v1521
        %v1829 = vsel %vm1807, %v1796, %v1523
        %v1830 = vsel %vm1807, %v1797, %v1525
        %v1831 = vsel %vm1807, %v1798, %v1527
        %v1832 = vsel %vm1807, %v1799, %v1529
        %v1833 = vsel %vm1807, %v1800, %v1531
        %v1834 = vsel %vm1807, %v1801, %v1533
        %v1835 = vsel %vm1807, %v1802, %v1535
        %v1836 = vsel %vm1807, %v1803, %v1537
        %v1837 = vsel %vm1807, %v1804, %v1539
        %v1838 = vsel %vm1807, %v1805, %v1541
        %v1839 = vsel %vm1807, %v1806, %v1543
        %vm1840 = vcmask 293888
        %v1842 = vsel %vm1840, %v1808, 0
        %v1845 = vsel %vm1840, %v1809, 0
        %v1848 = vsel %vm1840, %v1810, 0
        %v1851 = vsel %vm1840, %v1811, 0
        %v1854 = vsel %vm1840, %v1812, 0
        %v1857 = vsel %vm1840, %v1813, 0
        %v1860 = vsel %vm1840, %v1814, 0
        %v1863 = vsel %vm1840, %v1815, 0
        %v1866 = vsel %vm1840, %v1816, 0
        %v1869 = vsel %vm1840, %v1817, 0
        %v1872 = vsel %vm1840, %v1818, 0
        %v1875 = vsel %vm1840, %v1819, 0
        %v1878 = vsel %vm1840, %v1820, 0
        %v1881 = vsel %vm1840, %v1821, 0
        %v1884 = vsel %vm1840, %v1822, 0
        %v1887 = vsel %vm1840, %v1823, 0
        %v1890 = vsel %vm1840, %v1824, 0
        %v1893 = vsel %vm1840, %v1825, 0
        %v1896 = vsel %vm1840, %v1826, 0
        %v1899 = vsel %vm1840, %v1827, 0
        %v1902 = vsel %vm1840, %v1828, 0
        %v1905 = vsel %vm1840, %v1829, 0
        %v1908 = vsel %vm1840, %v1830, 0
        %v1911 = vsel %vm1840, %v1831, 0
        %v1914 = vsel %vm1840, %v1832, 0
        %v1917 = vsel %vm1840, %v1833, 0
        %v1920 = vsel %vm1840, %v1834, 0
        %v1923 = vsel %vm1840, %v1835, 0
        %v1926 = vsel %vm1840, %v1836, 0
        %v1929 = vsel %vm1840, %v1837, 0
        %v1932 = vsel %vm1840, %v1838, 0
        %v1935 = vsel %vm1840, %v1839, 0
        %vm1937 = vcmask 1043456
        %v1939 = vsel %vm1937, %v261, 0
        %1941 = vmatprep.subr.mxu0 0.0
        %1942 = vmatpush1.msra.mxu0 %v257
        %1943 = vmatprep.subr.mxu0 0.0
        %1944 = vmatpush1.msra.mxu0 %v258
        %1945 = vmatprep.subr.mxu0 0.0
        %1946 = vmatpush1.msra.mxu0 %v259
        %1947 = vmatprep.subr.mxu0 0.0
        %1948 = vmatpush1.msra.mxu0 %v260
        %1949 = vmatprep.subr.mxu0 0.0
        %1950 = vmatpush1.msra.mxu0 %v1939
        %1951 = vmatprep.subr.mxu0 0.0
        %1952 = vmatpush1.msra.mxu0 0.0
        %1953 = vmatprep.subr.mxu0 0.0
        %1954 = vmatpush1.msra.mxu0 0.0
        %1955 = vmatprep.subr.mxu0 0.0
        %1956 = vmatpush1.msra.mxu0 0.0
        %1957 = vmatprep.subr.mxu0 0.0
        %1958 = vmatpush1.msra.mxu0 0.0
        %1959 = vmatprep.subr.mxu0 0.0
        %1960 = vmatpush1.msra.mxu0 0.0
        %1961 = vmatprep.subr.mxu0 0.0
        %1962 = vmatpush1.msra.mxu0 0.0
        %1963 = vmatprep.subr.mxu0 0.0
        %1964 = vmatpush1.msra.mxu0 0.0
        %1965 = vmatprep.subr.mxu0 0.0
        %1966 = vmatpush1.msra.mxu0 0.0
        %1967 = vmatprep.subr.mxu0 0.0
        %1968 = vmatpush1.msra.mxu0 0.0
        %1969 = vmatprep.subr.mxu0 0.0
        %1970 = vmatpush1.msra.mxu0 0.0
        %1971 = vmatprep.subr.mxu0 0.0
        %1972 = vmatpush1.msra.mxu0 0.0
        %1973 = vmatprep.subr.mxu0 0.0
        %1974 = vmatpush1.msra.mxu0 0.0
        %1975 = vmatprep.subr.mxu0 0.0
        %1976 = vmatpush1.msra.mxu0 0.0
        %1977 = vmatprep.subr.mxu0 0.0
        %1978 = vmatpush1.msra.mxu0 0.0
        %1979 = vmatprep.subr.mxu0 0.0
        %1980 = vmatpush1.msra.mxu0 0.0
        %1981 = vmatprep.subr.mxu0 0.0
        %1982 = vmatpush1.msra.mxu0 0.0
        %1983 = vmatprep.subr.mxu0 0.0
        %1984 = vmatpush1.msra.mxu0 0.0
        %1985 = vmatprep.subr.mxu0 0.0
        %1986 = vmatpush1.msra.mxu0 0.0
        %1987 = vmatprep.subr.mxu0 0.0
        %1988 = vmatpush1.msra.mxu0 0.0
        %1989 = vmatprep.subr.mxu0 0.0
        %1990 = vmatpush1.msra.mxu0 0.0
        %1991 = vmatprep.subr.mxu0 0.0
        %1992 = vmatpush1.msra.mxu0 0.0
        %1993 = vmatprep.subr.mxu0 0.0
        %1994 = vmatpush1.msra.mxu0 0.0
        %1995 = vmatprep.subr.mxu0 0.0
        %1996 = vmatpush1.msra.mxu0 0.0
        %1997 = vmatprep.subr.mxu0 0.0
        %1998 = vmatpush1.msra.mxu0 0.0
        %1999 = vmatprep.subr.mxu0 0.0
        %2000 = vmatpush1.msra.mxu0 0.0
        %2001 = vmatprep.subr.mxu0 0.0
        %2002 = vmatpush1.msra.mxu0 0.0
        %2003 = vmatprep.subr.mxu0 0.0
        %2004 = vmatpush1.msra.mxu0 0.0
        %2005 = vmatprep.mubr.f32.mxu0 0.0
        %2006 = vmatmul.mubr.f32.gmra.mrb[0].mxu0 %v1842
        %v2007 = vpop.f32.mrb[0].mxu0
        %v2008 = vadd.f32 0.0, %v2007
        %v2009 = vpop.f32.mrb[0].mxu0
        %2010 = vmatprep.mubr.f32.mxu0 0.0
        %2011 = vmatmul.mubr.f32.gmra.mrb[0].mxu0 %v1845
        %v2012 = vpop.f32.mrb[0].mxu0
        %v2013 = vadd.f32 0.0, %v2012
        %v2014 = vpop.f32.mrb[0].mxu0
        %2015 = vmatprep.mubr.f32.mxu0 0.0
        %2016 = vmatmul.mubr.f32.gmra.mrb[0].mxu0 %v1848
        %v2017 = vpop.f32.mrb[0].mxu0
        %v2018 = vadd.f32 0.0, %v2017
        %v2019 = vpop.f32.mrb[0].mxu0
        %2020 = vmatprep.mubr.f32.mxu0 0.0
        %2021 = vmatmul.mubr.f32.gmra.mrb[0].mxu0 %v1851
        %v2022 = vpop.f32.mrb[0].mxu0
        %v2023 = vadd.f32 0.0, %v2022
        %v2024 = vpop.f32.mrb[0].mxu0
        %2025 = vmatprep.mubr.f32.mxu0 0.0
        %2026 = vmatmul.mubr.f32.gmra.mrb[0].mxu0 %v1854
        %v2027 = vpop.f32.mrb[0].mxu0
        %v2028 = vadd.f32 0.0, %v2027
        %v2029 = vpop.f32.mrb[0].mxu0
        %2030 = vmatprep.mubr.f32.mxu0 0.0
        %2031 = vmatmul.mubr.f32.gmra.mrb[0].mxu0 %v1857
        %v2032 = vpop.f32.mrb[0].mxu0
        %v2033 = vadd.f32 0.0, %v2032
        %v2034 = vpop.f32.mrb[0].mxu0
        %2035 = vmatprep.mubr.f32.mxu0 0.0
        %2036 = vmatmul.mubr.f32.gmra.mrb[0].mxu0 %v1860
        %v2037 = vpop.f32.mrb[0].mxu0
        %v2038 = vadd.f32 0.0, %v2037
        %v2039 = vpop.f32.mrb[0].mxu0
        %2040 = vmatprep.mubr.f32.mxu0 0.0
        %2041 = vmatmul.mubr.f32.gmra.mrb[0].mxu0 %v1863
        %v2042 = vpop.f32.mrb[0].mxu0
        %v2043 = vadd.f32 0.0, %v2042
        %v2044 = vpop.f32.mrb[0].mxu0
        %2045 = vmatprep.mubr.f32.mxu0 0.0
        %2046 = vmatmul.mubr.f32.gmra.mrb[0].mxu0 %v1866
        %v2047 = vpop.f32.mrb[0].mxu0
        %v2048 = vadd.f32 0.0, %v2047
        %v2049 = vpop.f32.mrb[0].mxu0
        %2050 = vmatprep.mubr.f32.mxu0 0.0
        %2051 = vmatmul.mubr.f32.gmra.mrb[0].mxu0 %v1869
        %v2052 = vpop.f32.mrb[0].mxu0
        %v2053 = vadd.f32 0.0, %v2052
        %v2054 = vpop.f32.mrb[0].mxu0
        %2055 = vmatprep.mubr.f32.mxu0 0.0
        %2056 = vmatmul.mubr.f32.gmra.mrb[0].mxu0 %v1872
        %v2057 = vpop.f32.mrb[0].mxu0
        %v2058 = vadd.f32 0.0, %v2057
        %v2059 = vpop.f32.mrb[0].mxu0
        %2060 = vmatprep.mubr.f32.mxu0 0.0
        %2061 = vmatmul.mubr.f32.gmra.mrb[0].mxu0 %v1875
        %v2062 = vpop.f32.mrb[0].mxu0
        %v2063 = vadd.f32 0.0, %v2062
        %v2064 = vpop.f32.mrb[0].mxu0
        %2065 = vmatprep.mubr.f32.mxu0 0.0
        %2066 = vmatmul.mubr.f32.gmra.mrb[0].mxu0 %v1878
        %v2067 = vpop.f32.mrb[0].mxu0
        %v2068 = vadd.f32 0.0, %v2067
        %v2069 = vpop.f32.mrb[0].mxu0
        %2070 = vmatprep.mubr.f32.mxu0 0.0
        %2071 = vmatmul.mubr.f32.gmra.mrb[0].mxu0 %v1881
        %v2072 = vpop.f32.mrb[0].mxu0
        %v2073 = vadd.f32 0.0, %v2072
        %v2074 = vpop.f32.mrb[0].mxu0
        %2075 = vmatprep.mubr.f32.mxu0 0.0
        %2076 = vmatmul.mubr.f32.gmra.mrb[0].mxu0 %v1884
        %v2077 = vpop.f32.mrb[0].mxu0
        %v2078 = vadd.f32 0.0, %v2077
        %v2079 = vpop.f32.mrb[0].mxu0
        %2080 = vmatprep.mubr.f32.mxu0 0.0
        %2081 = vmatmul.mubr.f32.gmra.mrb[0].mxu0 %v1887
        %v2082 = vpop.f32.mrb[0].mxu0
        %v2083 = vadd.f32 0.0, %v2082
        %v2084 = vpop.f32.mrb[0].mxu0
        %2085 = vmatprep.mubr.f32.mxu0 0.0
        %2086 = vmatmul.mubr.f32.gmra.mrb[0].mxu0 %v1890
        %v2087 = vpop.f32.mrb[0].mxu0
        %v2088 = vadd.f32 0.0, %v2087
        %v2089 = vpop.f32.mrb[0].mxu0
        %2090 = vmatprep.mubr.f32.mxu0 0.0
        %2091 = vmatmul.mubr.f32.gmra.mrb[0].mxu0 %v1893
        %v2092 = vpop.f32.mrb[0].mxu0
        %v2093 = vadd.f32 0.0, %v2092
        %v2094 = vpop.f32.mrb[0].mxu0
        %2095 = vmatprep.mubr.f32.mxu0 0.0
        %2096 = vmatmul.mubr.f32.gmra.mrb[0].mxu0 %v1896
        %v2097 = vpop.f32.mrb[0].mxu0
        %v2098 = vadd.f32 0.0, %v2097
        %v2099 = vpop.f32.mrb[0].mxu0
        %2100 = vmatprep.mubr.f32.mxu0 0.0
        %2101 = vmatmul.mubr.f32.gmra.mrb[0].mxu0 %v1899
        %v2102 = vpop.f32.mrb[0].mxu0
        %v2103 = vadd.f32 0.0, %v2102
        %v2104 = vpop.f32.mrb[0].mxu0
        %2105 = vmatprep.mubr.f32.mxu0 0.0
        %2106 = vmatmul.mubr.f32.gmra.mrb[0].mxu0 %v1902
        %v2107 = vpop.f32.mrb[0].mxu0
        %v2108 = vadd.f32 0.0, %v2107
        %v2109 = vpop.f32.mrb[0].mxu0
        %2110 = vmatprep.mubr.f32.mxu0 0.0
        %2111 = vmatmul.mubr.f32.gmra.mrb[0].mxu0 %v1905
        %v2112 = vpop.f32.mrb[0].mxu0
        %v2113 = vadd.f32 0.0, %v2112
        %v2114 = vpop.f32.mrb[0].mxu0
        %2115 = vmatprep.mubr.f32.mxu0 0.0
        %2116 = vmatmul.mubr.f32.gmra.mrb[0].mxu0 %v1908
        %v2117 = vpop.f32.mrb[0].mxu0
        %v2118 = vadd.f32 0.0, %v2117
        %v2119 = vpop.f32.mrb[0].mxu0
        %2120 = vmatprep.mubr.f32.mxu0 0.0
        %2121 = vmatmul.mubr.f32.gmra.mrb[0].mxu0 %v1911
        %v2122 = vpop.f32.mrb[0].mxu0
        %v2123 = vadd.f32 0.0, %v2122
        %v2124 = vpop.f32.mrb[0].mxu0
        %2125 = vmatprep.mubr.f32.mxu0 0.0
        %2126 = vmatmul.mubr.f32.gmra.mrb[0].mxu0 %v1914
        %v2127 = vpop.f32.mrb[0].mxu0
        %v2128 = vadd.f32 0.0, %v2127
        %v2129 = vpop.f32.mrb[0].mxu0
        %2130 = vmatprep.mubr.f32.mxu0 0.0
        %2131 = vmatmul.mubr.f32.gmra.mrb[0].mxu0 %v1917
        %v2132 = vpop.f32.mrb[0].mxu0
        %v2133 = vadd.f32 0.0, %v2132
        %v2134 = vpop.f32.mrb[0].mxu0
        %2135 = vmatprep.mubr.f32.mxu0 0.0
        %2136 = vmatmul.mubr.f32.gmra.mrb[0].mxu0 %v1920
        %v2137 = vpop.f32.mrb[0].mxu0
        %v2138 = vadd.f32 0.0, %v2137
        %v2139 = vpop.f32.mrb[0].mxu0
        %2140 = vmatprep.mubr.f32.mxu0 0.0
        %2141 = vmatmul.mubr.f32.gmra.mrb[0].mxu0 %v1923
        %v2142 = vpop.f32.mrb[0].mxu0
        %v2143 = vadd.f32 0.0, %v2142
        %v2144 = vpop.f32.mrb[0].mxu0
        %2145 = vmatprep.mubr.f32.mxu0 0.0
        %2146 = vmatmul.mubr.f32.gmra.mrb[0].mxu0 %v1926
        %v2147 = vpop.f32.mrb[0].mxu0
        %v2148 = vadd.f32 0.0, %v2147
        %v2149 = vpop.f32.mrb[0].mxu0
        %2150 = vmatprep.mubr.f32.mxu0 0.0
        %2151 = vmatmul.mubr.f32.gmra.mrb[0].mxu0 %v1929
        %v2152 = vpop.f32.mrb[0].mxu0
        %v2153 = vadd.f32 0.0, %v2152
        %v2154 = vpop.f32.mrb[0].mxu0
        %2155 = vmatprep.mubr.f32.mxu0 0.0
        %2156 = vmatmul.mubr.f32.gmra.mrb[0].mxu0 %v1932
        %v2157 = vpop.f32.mrb[0].mxu0
        %v2158 = vadd.f32 0.0, %v2157
        %v2159 = vpop.f32.mrb[0].mxu0
        %2160 = vmatprep.mubr.f32.mxu0 0.0
        %2161 = vmatmul.mubr.f32.gmra.mrb[0].mxu0 %v1935
        %v2162 = vpop.f32.mrb[0].mxu0
        %v2163 = vadd.f32 0.0, %v2162
        %v2164 = vpop.f32.mrb[0].mxu0
        %2165 = vdwg.mxu0
        %v2167 = vlaneseq
        %v2168 = vshrl.u32 %v2167, 7
        %v2169 = vsub.s32 0, %v2168
        %v2170 = vrot.slane %v255, %v2169
        %v2172 = vmul.f32 %v2008, %v2170
        %v2173 = vmul.f32 %v2013, %v2170
        %v2174 = vmul.f32 %v2018, %v2170
        %v2175 = vmul.f32 %v2023, %v2170
        %v2176 = vmul.f32 %v2028, %v2170
        %v2177 = vmul.f32 %v2033, %v2170
        %v2178 = vmul.f32 %v2038, %v2170
        %v2179 = vmul.f32 %v2043, %v2170
        %v2180 = vmul.f32 %v2048, %v2170
        %v2181 = vmul.f32 %v2053, %v2170
        %v2182 = vmul.f32 %v2058, %v2170
        %v2183 = vmul.f32 %v2063, %v2170
        %v2184 = vmul.f32 %v2068, %v2170
        %v2185 = vmul.f32 %v2073, %v2170
        %v2186 = vmul.f32 %v2078, %v2170
        %v2187 = vmul.f32 %v2083, %v2170
        %v2188 = vmul.f32 %v2088, %v2170
        %v2189 = vmul.f32 %v2093, %v2170
        %v2190 = vmul.f32 %v2098, %v2170
        %v2191 = vmul.f32 %v2103, %v2170
        %v2192 = vmul.f32 %v2108, %v2170
        %v2193 = vmul.f32 %v2113, %v2170
        %v2194 = vmul.f32 %v2118, %v2170
        %v2195 = vmul.f32 %v2123, %v2170
        %v2196 = vmul.f32 %v2128, %v2170
        %v2197 = vmul.f32 %v2133, %v2170
        %v2198 = vmul.f32 %v2138, %v2170
        %v2199 = vmul.f32 %v2143, %v2170
        %v2200 = vmul.f32 %v2148, %v2170
        %v2201 = vmul.f32 %v2153, %v2170
        %v2202 = vmul.f32 %v2158, %v2170
        %v2203 = vmul.f32 %v2163, %v2170
        %v2205 = vlaneseq
        %v2206 = vshrl.u32 %v2205, 7
        %v2207 = vsub.s32 0, %v2206
        %v2208 = vrot.slane %v256, %v2207
        %v2210 = vadd.f32 %v2172, %v2208
        %v2211 = vadd.f32 %v2173, %v2208
        %v2212 = vadd.f32 %v2174, %v2208
        %v2213 = vadd.f32 %v2175, %v2208
        %v2214 = vadd.f32 %v2176, %v2208
        %v2215 = vadd.f32 %v2177, %v2208
        %v2216 = vadd.f32 %v2178, %v2208
        %v2217 = vadd.f32 %v2179, %v2208
        %v2218 = vadd.f32 %v2180, %v2208
        %v2219 = vadd.f32 %v2181, %v2208
        %v2220 = vadd.f32 %v2182, %v2208
        %v2221 = vadd.f32 %v2183, %v2208
        %v2222 = vadd.f32 %v2184, %v2208
        %v2223 = vadd.f32 %v2185, %v2208
        %v2224 = vadd.f32 %v2186, %v2208
        %v2225 = vadd.f32 %v2187, %v2208
        %v2226 = vadd.f32 %v2188, %v2208
        %v2227 = vadd.f32 %v2189, %v2208
        %v2228 = vadd.f32 %v2190, %v2208
        %v2229 = vadd.f32 %v2191, %v2208
        %v2230 = vadd.f32 %v2192, %v2208
        %v2231 = vadd.f32 %v2193, %v2208
        %v2232 = vadd.f32 %v2194, %v2208
        %v2233 = vadd.f32 %v2195, %v2208
        %v2234 = vadd.f32 %v2196, %v2208
        %v2235 = vadd.f32 %v2197, %v2208
        %v2236 = vadd.f32 %v2198, %v2208
        %v2237 = vadd.f32 %v2199, %v2208
        %v2238 = vadd.f32 %v2200, %v2208
        %v2239 = vadd.f32 %v2201, %v2208
        %v2240 = vadd.f32 %v2202, %v2208
        %v2241 = vadd.f32 %v2203, %v2208
        %v2242 = vxor.u32 %v2210, 2147483648
        %v2243 = vxor.u32 %v2211, 2147483648
        %v2244 = vxor.u32 %v2212, 2147483648
        %v2245 = vxor.u32 %v2213, 2147483648
        %v2246 = vxor.u32 %v2214, 2147483648
        %v2247 = vxor.u32 %v2215, 2147483648
        %v2248 = vxor.u32 %v2216, 2147483648
        %v2249 = vxor.u32 %v2217, 2147483648
        %v2250 = vxor.u32 %v2218, 2147483648
        %v2251 = vxor.u32 %v2219, 2147483648
        %v2252 = vxor.u32 %v2220, 2147483648
        %v2253 = vxor.u32 %v2221, 2147483648
        %v2254 = vxor.u32 %v2222, 2147483648
        %v2255 = vxor.u32 %v2223, 2147483648
        %v2256 = vxor.u32 %v2224, 2147483648
        %v2257 = vxor.u32 %v2225, 2147483648
        %v2258 = vxor.u32 %v2226, 2147483648
        %v2259 = vxor.u32 %v2227, 2147483648
        %v2260 = vxor.u32 %v2228, 2147483648
        %v2261 = vxor.u32 %v2229, 2147483648
        %v2262 = vxor.u32 %v2230, 2147483648
        %v2263 = vxor.u32 %v2231, 2147483648
        %v2264 = vxor.u32 %v2232, 2147483648
        %v2265 = vxor.u32 %v2233, 2147483648
        %v2266 = vxor.u32 %v2234, 2147483648
        %v2267 = vxor.u32 %v2235, 2147483648
        %v2268 = vxor.u32 %v2236, 2147483648
        %v2269 = vxor.u32 %v2237, 2147483648
        %v2270 = vxor.u32 %v2238, 2147483648
        %v2271 = vxor.u32 %v2239, 2147483648
        %v2272 = vxor.u32 %v2240, 2147483648
        %v2273 = vxor.u32 %v2241, 2147483648
        %v2274 = vmul.f32 %v2242, 1.442695
        %v2275 = vpow.pop %v2274
        %v2276 = vmul.f32 %v2243, 1.442695
        %v2277 = vpow.pop %v2276
        %v2278 = vmul.f32 %v2244, 1.442695
        %v2279 = vpow.pop %v2278
        %v2280 = vmul.f32 %v2245, 1.442695
        %v2281 = vpow.pop %v2280
        %v2282 = vmul.f32 %v2246, 1.442695
        %v2283 = vpow.pop %v2282
        %v2284 = vmul.f32 %v2247, 1.442695
        %v2285 = vpow.pop %v2284
        %v2286 = vmul.f32 %v2248, 1.442695
        %v2287 = vpow.pop %v2286
        %v2288 = vmul.f32 %v2249, 1.442695
        %v2289 = vpow.pop %v2288
        %v2290 = vmul.f32 %v2250, 1.442695
        %v2291 = vpow.pop %v2290
        %v2292 = vmul.f32 %v2251, 1.442695
        %v2293 = vpow.pop %v2292
        %v2294 = vmul.f32 %v2252, 1.442695
        %v2295 = vpow.pop %v2294
        %v2296 = vmul.f32 %v2253, 1.442695
        %v2297 = vpow.pop %v2296
        %v2298 = vmul.f32 %v2254, 1.442695
        %v2299 = vpow.pop %v2298
        %v2300 = vmul.f32 %v2255, 1.442695
        %v2301 = vpow.pop %v2300
        %v2302 = vmul.f32 %v2256, 1.442695
        %v2303 = vpow.pop %v2302
        %v2304 = vmul.f32 %v2257, 1.442695
        %v2305 = vpow.pop %v2304
        %v2306 = vmul.f32 %v2258, 1.442695
        %v2307 = vpow.pop %v2306
        %v2308 = vmul.f32 %v2259, 1.442695
        %v2309 = vpow.pop %v2308
        %v2310 = vmul.f32 %v2260, 1.442695
        %v2311 = vpow.pop %v2310
        %v2312 = vmul.f32 %v2261, 1.442695
        %v2313 = vpow.pop %v2312
        %v2314 = vmul.f32 %v2262, 1.442695
        %v2315 = vpow.pop %v2314
        %v2316 = vmul.f32 %v2263, 1.442695
        %v2317 = vpow.pop %v2316
        %v2318 = vmul.f32 %v2264, 1.442695
        %v2319 = vpow.pop %v2318
        %v2320 = vmul.f32 %v2265, 1.442695
        %v2321 = vpow.pop %v2320
        %v2322 = vmul.f32 %v2266, 1.442695
        %v2323 = vpow.pop %v2322
        %v2324 = vmul.f32 %v2267, 1.442695
        %v2325 = vpow.pop %v2324
        %v2326 = vmul.f32 %v2268, 1.442695
        %v2327 = vpow.pop %v2326
        %v2328 = vmul.f32 %v2269, 1.442695
        %v2329 = vpow.pop %v2328
        %v2330 = vmul.f32 %v2270, 1.442695
        %v2331 = vpow.pop %v2330
        %v2332 = vmul.f32 %v2271, 1.442695
        %v2333 = vpow.pop %v2332
        %v2334 = vmul.f32 %v2272, 1.442695
        %v2335 = vpow.pop %v2334
        %v2336 = vmul.f32 %v2273, 1.442695
        %v2337 = vpow.pop %v2336
        %v2338 = vadd.f32 %v2275, 1.0
        %v2339 = vadd.f32 %v2277, 1.0
        %v2340 = vadd.f32 %v2279, 1.0
        %v2341 = vadd.f32 %v2281, 1.0
        %v2342 = vadd.f32 %v2283, 1.0
        %v2343 = vadd.f32 %v2285, 1.0
        %v2344 = vadd.f32 %v2287, 1.0
        %v2345 = vadd.f32 %v2289, 1.0
        %v2346 = vadd.f32 %v2291, 1.0
        %v2347 = vadd.f32 %v2293, 1.0
        %v2348 = vadd.f32 %v2295, 1.0
        %v2349 = vadd.f32 %v2297, 1.0
        %v2350 = vadd.f32 %v2299, 1.0
        %v2351 = vadd.f32 %v2301, 1.0
        %v2352 = vadd.f32 %v2303, 1.0
        %v2353 = vadd.f32 %v2305, 1.0
        %v2354 = vadd.f32 %v2307, 1.0
        %v2355 = vadd.f32 %v2309, 1.0
        %v2356 = vadd.f32 %v2311, 1.0
        %v2357 = vadd.f32 %v2313, 1.0
        %v2358 = vadd.f32 %v2315, 1.0
        %v2359 = vadd.f32 %v2317, 1.0
        %v2360 = vadd.f32 %v2319, 1.0
        %v2361 = vadd.f32 %v2321, 1.0
        %v2362 = vadd.f32 %v2323, 1.0
        %v2363 = vadd.f32 %v2325, 1.0
        %v2364 = vadd.f32 %v2327, 1.0
        %v2365 = vadd.f32 %v2329, 1.0
        %v2366 = vadd.f32 %v2331, 1.0
        %v2367 = vadd.f32 %v2333, 1.0
        %v2368 = vadd.f32 %v2335, 1.0
        %v2369 = vadd.f32 %v2337, 1.0
        %v2370 = vrcp.pop %v2338
        %v2371 = vmul.f32 1.0, %v2370
        %v2372 = vrcp.pop %v2339
        %v2373 = vmul.f32 1.0, %v2372
        %v2374 = vrcp.pop %v2340
        %v2375 = vmul.f32 1.0, %v2374
        %v2376 = vrcp.pop %v2341
        %v2377 = vmul.f32 1.0, %v2376
        %v2378 = vrcp.pop %v2342
        %v2379 = vmul.f32 1.0, %v2378
        %v2380 = vrcp.pop %v2343
        %v2381 = vmul.f32 1.0, %v2380
        %v2382 = vrcp.pop %v2344
        %v2383 = vmul.f32 1.0, %v2382
        %v2384 = vrcp.pop %v2345
        %v2385 = vmul.f32 1.0, %v2384
        %v2386 = vrcp.pop %v2346
        %v2387 = vmul.f32 1.0, %v2386
        %v2388 = vrcp.pop %v2347
        %v2389 = vmul.f32 1.0, %v2388
        %v2390 = vrcp.pop %v2348
        %v2391 = vmul.f32 1.0, %v2390
        %v2392 = vrcp.pop %v2349
        %v2393 = vmul.f32 1.0, %v2392
        %v2394 = vrcp.pop %v2350
        %v2395 = vmul.f32 1.0, %v2394
        %v2396 = vrcp.pop %v2351
        %v2397 = vmul.f32 1.0, %v2396
        %v2398 = vrcp.pop %v2352
        %v2399 = vmul.f32 1.0, %v2398
        %v2400 = vrcp.pop %v2353
        %v2401 = vmul.f32 1.0, %v2400
        %v2402 = vrcp.pop %v2354
        %v2403 = vmul.f32 1.0, %v2402
        %v2404 = vrcp.pop %v2355
        %v2405 = vmul.f32 1.0, %v2404
        %v2406 = vrcp.pop %v2356
        %v2407 = vmul.f32 1.0, %v2406
        %v2408 = vrcp.pop %v2357
        %v2409 = vmul.f32 1.0, %v2408
        %v2410 = vrcp.pop %v2358
        %v2411 = vmul.f32 1.0, %v2410
        %v2412 = vrcp.pop %v2359
        %v2413 = vmul.f32 1.0, %v2412
        %v2414 = vrcp.pop %v2360
        %v2415 = vmul.f32 1.0, %v2414
        %v2416 = vrcp.pop %v2361
        %v2417 = vmul.f32 1.0, %v2416
        %v2418 = vrcp.pop %v2362
        %v2419 = vmul.f32 1.0, %v2418
        %v2420 = vrcp.pop %v2363
        %v2421 = vmul.f32 1.0, %v2420
        %v2422 = vrcp.pop %v2364
        %v2423 = vmul.f32 1.0, %v2422
        %v2424 = vrcp.pop %v2365
        %v2425 = vmul.f32 1.0, %v2424
        %v2426 = vrcp.pop %v2366
        %v2427 = vmul.f32 1.0, %v2426
        %v2428 = vrcp.pop %v2367
        %v2429 = vmul.f32 1.0, %v2428
        %v2430 = vrcp.pop %v2368
        %v2431 = vmul.f32 1.0, %v2430
        %v2432 = vrcp.pop %v2369
        %v2433 = vmul.f32 1.0, %v2432
        %v2434 = vmul.f32 %v2210, %v2371
        %v2435 = vmul.f32 %v2211, %v2373
        %v2436 = vmul.f32 %v2212, %v2375
        %v2437 = vmul.f32 %v2213, %v2377
        %v2438 = vmul.f32 %v2214, %v2379
        %v2439 = vmul.f32 %v2215, %v2381
        %v2440 = vmul.f32 %v2216, %v2383
        %v2441 = vmul.f32 %v2217, %v2385
        %v2442 = vmul.f32 %v2218, %v2387
        %v2443 = vmul.f32 %v2219, %v2389
        %v2444 = vmul.f32 %v2220, %v2391
        %v2445 = vmul.f32 %v2221, %v2393
        %v2446 = vmul.f32 %v2222, %v2395
        %v2447 = vmul.f32 %v2223, %v2397
        %v2448 = vmul.f32 %v2224, %v2399
        %v2449 = vmul.f32 %v2225, %v2401
        %v2450 = vmul.f32 %v2226, %v2403
        %v2451 = vmul.f32 %v2227, %v2405
        %v2452 = vmul.f32 %v2228, %v2407
        %v2453 = vmul.f32 %v2229, %v2409
        %v2454 = vmul.f32 %v2230, %v2411
        %v2455 = vmul.f32 %v2231, %v2413
        %v2456 = vmul.f32 %v2232, %v2415
        %v2457 = vmul.f32 %v2233, %v2417
        %v2458 = vmul.f32 %v2234, %v2419
        %v2459 = vmul.f32 %v2235, %v2421
        %v2460 = vmul.f32 %v2236, %v2423
        %v2461 = vmul.f32 %v2237, %v2425
        %v2462 = vmul.f32 %v2238, %v2427
        %v2463 = vmul.f32 %v2239, %v2429
        %v2464 = vmul.f32 %v2240, %v2431
        %v2465 = vmul.f32 %v2241, %v2433
        %2466 = vst [vmem:[%s239] sm:$0xff] %v2434
        %2467 = vst [vmem:[%s239 + $0x8] sm:$0xff] %v2435
        %2468 = vst [vmem:[%s239 + $0x10] sm:$0xff] %v2436
        %2469 = vst [vmem:[%s239 + $0x18] sm:$0xff] %v2437
        %2470 = vst [vmem:[%s239 + $0x20] sm:$0xff] %v2438
        %2471 = vst [vmem:[%s239 + $0x28] sm:$0xff] %v2439
        %2472 = vst [vmem:[%s239 + $0x30] sm:$0xff] %v2440
        %2473 = vst [vmem:[%s239 + $0x38] sm:$0xff] %v2441
        %2474 = vst [vmem:[%s239 + $0x40] sm:$0xff] %v2442
        %2475 = vst [vmem:[%s239 + $0x48] sm:$0xff] %v2443
        %2476 = vst [vmem:[%s239 + $0x50] sm:$0xff] %v2444
        %2477 = vst [vmem:[%s239 + $0x58] sm:$0xff] %v2445
        %2478 = vst [vmem:[%s239 + $0x60] sm:$0xff] %v2446
        %2479 = vst [vmem:[%s239 + $0x68] sm:$0xff] %v2447
        %2480 = vst [vmem:[%s239 + $0x70] sm:$0xff] %v2448
        %2481 = vst [vmem:[%s239 + $0x78] sm:$0xff] %v2449
        %2482 = vst [vmem:[%s239 + $0x80] sm:$0xff] %v2450
        %2483 = vst [vmem:[%s239 + $0x88] sm:$0xff] %v2451
        %2484 = vst [vmem:[%s239 + $0x90] sm:$0xff] %v2452
        %2485 = vst [vmem:[%s239 + $0x98] sm:$0xff] %v2453
        %2486 = vst [vmem:[%s239 + $0xa0] sm:$0xff] %v2454
        %2487 = vst [vmem:[%s239 + $0xa8] sm:$0xff] %v2455
        %2488 = vst [vmem:[%s239 + $0xb0] sm:$0xff] %v2456
        %2489 = vst [vmem:[%s239 + $0xb8] sm:$0xff] %v2457
        %2490 = vst [vmem:[%s239 + $0xc0] sm:$0xff] %v2458
        %2491 = vst [vmem:[%s239 + $0xc8] sm:$0xff] %v2459
        %2492 = vst [vmem:[%s239 + $0xd0] sm:$0xff] %v2460
        %2493 = vst [vmem:[%s239 + $0xd8] sm:$0xff] %v2461
        %2494 = vst [vmem:[%s239 + $0xe0] sm:$0xff] %v2462
        %2495 = vst [vmem:[%s239 + $0xe8] sm:$0xff] %v2463
        %2496 = vst [vmem:[%s239 + $0xf0] sm:$0xff] %v2464
        %2497 = vst [vmem:[%s239 + $0xf8] sm:$0xff] %v2465
        %s2498 = sand.u32 %s144, 1
        %s2499 = scalar_lea.sflag [#allocation3], %s2498
        %s2500 = sand.u32 %s144, 1
        %s2501 = smul.addr %s2500, 256
        %s2502 = scalar_lea.vmem [#allocation2], %s2501
        // Predicated region
        $region37: #{tpu_custom_call.1} parent=35 // pred_check
          %p2503 = pneg %p154
        $region38: #{tpu_custom_call.1} parent=35 // pred_check_branch
          %2505 = sbr.rel (%p2503) target = $region40
        $region39: #{tpu_custom_call.1} parent=35 // pred_region
          %s2507 = ssub.s32 4096, 4096
          %2508 = vsyncadd %s2499, %s2507
          %s2509 = smul.addr %s22, 32
          %s2510 = sadd.s32 %s23, %s2509
          %s2511 = smul.addr %s2510, 128
          %s2512 = scalar_lea.hbm %s4, %s2511
          %s2513 = sshll.u32 %s2502, 4
          %s2514 = int_to_ptr.vmem [resolvable:$true] %s2513
          %2519 = dma.vmem_to_hbm [thread:$0]  %s2514, 4096, %s2512, %s2499, 128, 128, 8
        $region40: #{tpu_custom_call.1} parent=35 // pred_fallthru
          _
      $region36: #{tpu_custom_call.1} parent=5 // pred_fallthru
        _
      %p2520 = scmp.le.s32.totalorder 2, %s13
      // Predicated region
      $region41: #{tpu_custom_call.1} parent=5 // pred_check
        %p2521 = pneg %p2520
      $region42: #{tpu_custom_call.1} parent=5 // pred_check_branch
        %2523 = sbr.rel (%p2521) target = $region44
      $region43: #{tpu_custom_call.1} parent=5 // pred_region
        %s2524 = ssub.s32 %s13, 2
        // Predicated region
        $region45: #{tpu_custom_call.1} parent=43 // pred_check
          %p2525 = pneg %p160
        $region46: #{tpu_custom_call.1} parent=43 // pred_check_branch
          %2527 = sbr.rel (%p2525) target = $region48
        $region47: #{tpu_custom_call.1} parent=43 // pred_region
          %s2528 = sand.u32 %s145, 1
          %s2529 = scalar_lea.sflag [#allocation3], %s2528
          %s2530 = sand.u32 %s145, 1
          %s2531 = smul.addr %s2530, 256
          %s2532 = scalar_lea.vmem [#allocation2], %s2531
          %2533 = dma.done %s2529, 4096
        $region48: #{tpu_custom_call.1} parent=43 // pred_fallthru
          _
      $region44: #{tpu_custom_call.1} parent=5 // pred_fallthru
        _
    $region6: #{tpu_custom_call.1} parent=1 // loop_footer
      %s17 = sadd.s32 1, %s13
    $region7: #{tpu_custom_call.1} parent=1 // loop_footer_branch
      %12 = sbr.rel target = $region3
    $region8: #{tpu_custom_call.1} parent=1 // loop_exit
      _
    %2534 = vsyncpa [#allocation3], 1
    %s2535 = scalar_lea.sflag [#allocation3], 1
    %2536 = vsyncpa %s2535, 1

</llo_original>
